<compile_context>
chip_gen: v6e
topology: v6e:2x2x1
jax: 0.10.0
libtpu: 0.0.40
codegen_flags: <defaults>
</compile_context>

<pallas_src>
import math
import functools

import jax
import jax.numpy as jnp
from jax.experimental import pallas as pl
from jax.experimental.pallas import tpu as pltpu

_MIB = 1024 * 1024


def _round_up(x, m):
    return ((x + m - 1) // m) * m


def _round_down(x, m):
    return (x // m) * m


def _vmem_budget_bytes():
    """Generation-aware VMEM budget for (resident table + pipelined tiles)."""
    try:
        cap = pltpu.get_tpu_info().vmem_capacity_bytes
    except Exception:
        cap = 128 * _MIB                 # assume 128 MiB parts if query fails
    if cap <= 80 * _MIB:                 # v7x-class: 64 MiB per TensorCore
        return 44 * _MIB
    return 72 * _MIB                     # v5e / v6e: 128 MiB per TensorCore


def _embed_kernel(ids_ref, emb_ref, out_ref, *, scale):
    # ids_ref: (TM, 1) int32        -- pipelined VMEM tile of token ids
    # emb_ref: (Vpad, D) f32/bf16   -- whole table, resident in VMEM (1 copy)
    # out_ref: (TM, D)              -- pipelined VMEM output tile
    ids = ids_ref[...]                                       # (TM, 1)
    tm = ids.shape[0]
    vpad = emb_ref.shape[0]                                  # multiple of 128
    # Lane-dense one-hot: Vpad sits on the lane axis (multiple of 128), so the
    # iota/compare fill whole vregs and the MXU contraction depth is clean.
    vocab_iota = jax.lax.broadcasted_iota(jnp.int32, (tm, vpad), 1)
    one_hot = (vocab_iota == ids).astype(emb_ref.dtype)      # exactly 0 / 1
    # One-hot row gather on the MXU.  precision=HIGHEST keeps f32 table rows
    # bit-exact through the MXU multi-pass decomposition (exact when one
    # operand is exactly 0/1); for bf16 tables it is a single native pass.
    # NB: Precision.HIGH (3-pass) would be cheaper on v5e and is also exact
    # for a 0/1 one-hot, but HIGHEST is the portable, always-lowered choice.
    emb = jnp.dot(one_hot, emb_ref[...],
                  preferred_element_type=jnp.float32,
                  precision=jax.lax.Precision.HIGHEST)       # (TM, D) f32
    out_ref[...] = (emb * scale).astype(out_ref.dtype)


def input_embeddings_forward(x, embedding_table, *, d_model, tile_m=1024,
                             out_dtype=None, vmem_budget_bytes=None):
    """Pallas equivalent of: nn.Embedding(vocab, d_model)(x) * sqrt(d_model).

    x: int token ids, shape (batch, seq)
    embedding_table: (vocab_size, d_model) float32 or bfloat16
    returns: (batch, seq, d_model) in `out_dtype` (default: table dtype)

    Note: ids >= vocab_size produce all-zero rows (no bounds error), unlike
    nn.Embedding which would raise.
    """
    batch, seq = x.shape
    vocab_size, d_model_tbl = embedding_table.shape
    assert d_model_tbl == d_model
    if out_dtype is None:
        out_dtype = embedding_table.dtype
    if vmem_budget_bytes is None:
        vmem_budget_bytes = _vmem_budget_bytes()

    ids_flat = x.reshape(-1, 1).astype(jnp.int32)            # (T, 1)
    t_total = ids_flat.shape[0]

    emb_itemsize = jnp.dtype(embedding_table.dtype).itemsize
    out_itemsize = jnp.dtype(out_dtype).itemsize

    # Vocab padded to a lane multiple (128).
    v_pad = _round_up(vocab_size, 128)
    table_bytes = v_pad * d_model * emb_itemsize

    # TODO(synk): for large vocabularies (v_pad beyond ~1-2K padded) switch to
    # a scalar-prefetch / DMA row-gather path; the one-hot matmul needs the
    # full table resident in VMEM and burns T*Vpad*D MXU flops.
    headroom = 2 * _MIB
    if table_bytes + headroom > vmem_budget_bytes:
        raise ValueError(
            "embedding table too large for the VMEM one-hot gather strategy; "
            "a DMA row-gather path is required for this vocab size")

    # Per-token-row VMEM cost of one grid step: double-buffered id + out tiles,
    # int32 iota, one-hot (table dtype), f32 dot result.
    row_bytes = (2 * 1 * 4
                 + 2 * d_model * out_itemsize
                 + v_pad * 4
                 + v_pad * emb_itemsize
                 + d_model * 4)
    max_tile_rows = (vmem_budget_bytes - table_bytes - headroom) // row_bytes

    t_rows = _round_up(t_total, 8)        # minimal sublane-aligned row count
    if max_tile_rows < min(128, t_rows):
        raise ValueError(
            "VMEM budget leaves fewer than 128 token rows per tile; use a DMA "
            "row-gather path or raise vmem_budget_bytes instead of tiny tiles")

    # ---- token tile selection -------------------------------------------
    if max_tile_rows >= 256:
        vmem_cap_rows = _round_down(max_tile_rows, 256)
    else:
        vmem_cap_rows = _round_down(max_tile_rows, 8)
    tile = min(_round_up(max(tile_m, 256), 256), vmem_cap_rows)
    # Keep >= 2 grid steps for moderately large T so "parallel" can shard the
    # grid across both TensorCores on v7x.
    if t_total >= 1024:
        tile = min(tile, max(256, _round_down(_round_up(t_total, 256) // 2, 256)))
    tile = min(tile, t_rows)
    tile = max(tile, 8)
    # Prefer a tile that divides T exactly: avoids both id/out padding and the
    # post-kernel out[:T] slice (which would re-read/write the whole output).
    if tile >= 256 and t_total % 256 == 0:
        d = _round_down(tile, 256)
        while d >= 256 and t_total % d != 0:
            d -= 256
        if d >= 256:
            tile = d
    tile_m = tile

    t_pad = _round_up(t_total, tile_m)
    if t_pad != t_total:
        ids_flat = jnp.pad(ids_flat, ((0, t_pad - t_total), (0, 0)))

    emb_pad = embedding_table
    if v_pad != vocab_size:
        emb_pad = jnp.pad(embedding_table, ((0, v_pad - vocab_size), (0, 0)))

    scale = float(math.sqrt(d_model))
    grid = (t_pad // tile_m,)

    # Scoped-VMEM limit matched to the actual requirement (+ headroom) rather
    # than the generation-dependent default (16 MiB v5e / 32 MiB v6e, v7x).
    vmem_need = table_bytes + tile_m * row_bytes + headroom
    vmem_limit = int(min(vmem_budget_bytes, max(vmem_need, 16 * _MIB)))

    out = pl.pallas_call(
        functools.partial(_embed_kernel, scale=scale),
        out_shape=jax.ShapeDtypeStruct((t_pad, d_model), out_dtype),
        grid_spec=pltpu.PrefetchScalarGridSpec(
            num_scalar_prefetch=0,
            grid=grid,
            in_specs=[
                # Pipelined token-id tiles.
                pl.BlockSpec((tile_m, 1), lambda i: (i, 0)),
                # Whole table resident in VMEM once (index never changes, so
                # pipelining / double-buffering it would just waste VMEM).
                pl.BlockSpec(memory_space=pltpu.MemorySpace.VMEM),
            ],
            out_specs=pl.BlockSpec((tile_m, d_model), lambda i: (i, 0)),
        ),
        compiler_params=pltpu.CompilerParams(
            dimension_semantics=("parallel",),
            vmem_limit_bytes=vmem_limit),
    )(ids_flat, emb_pad)

    if t_pad != t_total:
        out = out[:t_total]
    return out.reshape(batch, seq, d_model)


if __name__ == "__main__":
    d_model = 768
    vocab_size = 27

    key = jax.random.PRNGKey(0)
    k_emb, k_ids, k_ids2 = jax.random.split(key, 3)

    # nn.Embedding default init: N(0, 1)
    embedding_table = jax.random.normal(k_emb, (vocab_size, d_model),
                                        dtype=jnp.float32)

    # Small shape consistent with the module defaults: batch=2, seq=8.
    batch, seq = 2, 8
    x = jax.random.randint(k_ids, (batch, seq), 0, vocab_size, dtype=jnp.int32)
    out = input_embeddings_forward(x, embedding_table, d_model=d_model)
    out = jax.block_until_ready(out)
    ref = embedding_table[x] * math.sqrt(d_model)
    assert out.shape == (batch, seq, d_model)
    assert jnp.allclose(out, ref, atol=1e-6, rtol=1e-6)

    # A second shape that exercises the multi-step (2-TensorCore-friendly)
    # grid and the no-pad / no-slice path (T = 1024 -> tile_m = 512, grid=(2,)).
    batch2, seq2 = 4, 256
    x2 = jax.random.randint(k_ids2, (batch2, seq2), 0, vocab_size,
                            dtype=jnp.int32)
    out2 = input_embeddings_forward(x2, embedding_table, d_model=d_model)
    out2 = jax.block_until_ready(out2)
    ref2 = embedding_table[x2] * math.sqrt(d_model)
    assert out2.shape == (batch2, seq2, d_model)
    assert jnp.allclose(out2, ref2, atol=1e-6, rtol=1e-6)

    print("KERNEL_OK")
</pallas_src>

<mosaic_0001>
module attributes {stable_mosaic.version = 11 : i64} {
  func.func @_embed_kernel(%arg0: i32, %arg1: memref<16x1xi32, #tpu.memory_space<vmem>>, %arg2: memref<128x768xf32, #tpu.memory_space<vmem>>, %arg3: memref<16x768xf32, #tpu.memory_space<vmem>>) attributes {dimension_semantics = [#tpu.dimension_semantics<parallel>], iteration_bounds = array<i64: 1>, scalar_prefetch = 0 : i64, scratch_operands = 0 : i64, tpu.core_type = #tpu.core_type<tc>, window_params = [{transform_indices = @transform_0, window_bounds = array<i64: 16, 1>}, {pipeline_mode = #tpu.pipeline_mode<synchronous>, transform_indices = @transform_1, window_bounds = array<i64: 128, 768>}, {transform_indices = @transform_2, window_bounds = array<i64: 16, 768>}]} {
    %c0 = arith.constant 0 : index
    %c0_0 = arith.constant 0 : index
    %0 = vector.load %arg1[%c0, %c0_0] : memref<16x1xi32, #tpu.memory_space<vmem>>, vector<16x1xi32>
    %1 = tpu.iota {dimensions = array<i32: 1>} : vector<16x128xi32>
    %2 = vector.broadcast %0 : vector<16x1xi32> to vector<16x128xi32>
    %3 = arith.cmpi eq, %1, %2 : vector<16x128xi32>
    %4 = arith.extui %3 : vector<16x128xi1> to vector<16x128xi32>
    %5 = arith.sitofp %4 : vector<16x128xi32> to vector<16x128xf32>
    %c0_1 = arith.constant 0 : index
    %c0_2 = arith.constant 0 : index
    %6 = vector.load %arg2[%c0_1, %c0_2] : memref<128x768xf32, #tpu.memory_space<vmem>>, vector<128x768xf32>
    %cst = arith.constant dense<0.000000e+00> : vector<16x768xf32>
    %7 = tpu.matmul %5, %6, %cst {dimension_numbers = #tpu.dot_dimension_numbers<[1], [0], [0], [1], [0, 0, 1, 1], [], []>, precision = #tpu.contract_precision<fp32>} : vector<16x128xf32>, vector<128x768xf32>, vector<16x768xf32> -> vector<16x768xf32>
    %cst_3 = arith.constant 27.7128124 : f32
    %8 = vector.broadcast %cst_3 : f32 to vector<16x768xf32>
    %9 = arith.mulf %7, %8 : vector<16x768xf32>
    %c0_4 = arith.constant 0 : index
    %c0_5 = arith.constant 0 : index
    %10 = vector.load %arg3[%c0_4, %c0_5] : memref<16x768xf32, #tpu.memory_space<vmem>>, vector<16x768xf32>
    tpu.vector_store %arg3[%c0_4, %c0_5], %9 {strides = array<i32>} : memref<16x768xf32, #tpu.memory_space<vmem>>, vector<16x768xf32>,
    return
  }
  func.func @transform_0(%arg0: i32) -> (i32, i32) {
    %c0_i32 = arith.constant 0 : i32
    %c0_i32_0 = arith.constant 0 : i32
    return %arg0, %c0_i32 : i32, i32
  }
  func.func @transform_1(%arg0: i32) -> (i32, i32) {
    %c0_i32 = arith.constant 0 : i32
    %c0_i32_0 = arith.constant 0 : i32
    %c0_i32_1 = arith.constant 0 : i32
    return %c0_i32, %c0_i32_0 : i32, i32
  }
  func.func @transform_2(%arg0: i32) -> (i32, i32) {
    %c0_i32 = arith.constant 0 : i32
    %c0_i32_0 = arith.constant 0 : i32
    return %arg0, %c0_i32 : i32, i32
  }
}

</mosaic_0001>

<llo_original>
// kernel: tpu_custom_call.1
$region0: #{tpu_custom_call.1}
  #allocation0 [shape = 'u32[]', space=smem, size = 0x4, offset = 0x4, fixed_abs, tag = 'smem constant byte address 0x4 - core index']
  #allocation1 [shape = 'u32[144,128]{1,0:T(1,128)}', space=vmem, size = 0x12000, scoped, tag = 'internal scratch']
  %s0 = inlined_call_operand.vmem [shape: s32[16,1], index: 0, kind: input, shape index: {}]
  %s1 = inlined_call_operand.hbm [shape: f32[128,768], index: 1, kind: input, shape index: {}]
  %s2 = inlined_call_operand.hbm [shape: f32[16,768], index: 2, kind: output, shape index: {}]
  %s3 = sld [smem:[#allocation0]]
  $region22: #{tpu_custom_call.1} parent=0
    _
  %s5 = ssub.s32 1, %s3
  %s6 = scalar_select 0, %s5, %s3
  $region1: #{tpu_custom_call.1} parent=0
    #allocation2 [shape = 'u8[393216]{0}', space=vmem, size = 0x60000, scoped, tag = 'input window, operand 1, single buffered']
    #allocation3 [shape = 's32[1]{0}', space=sflag, size = 0x4, scoped, tag = 'scoped memory for tpu_custom_call.1']
    #allocation4 [shape = 's32[1]{0}', space=sflag, size = 0x4, scoped, tag = 'scoped memory for tpu_custom_call.1']
    #allocation5 [shape = 'u8[49152]{0}', space=vmem, size = 0xc000, scoped, tag = 'output window, operand 0, single buffered']
    %7 = vsyncpa [#allocation3], 0
    %8 = vsyncpa [#allocation4], 0
    // Predicated region
    $region2: #{tpu_custom_call.1} parent=1 // pred_check
      _
    $region3: #{tpu_custom_call.1} parent=1 // pred_check_branch
      %10 = sbr.rel (0) target = $region5
    $region4: #{tpu_custom_call.1} parent=1 // pred_region
      _
    $region5: #{tpu_custom_call.1} parent=1 // pred_fallthru
      _
    // Predicated region
    $region6: #{tpu_custom_call.1} parent=1 // pred_check
      _
    $region7: #{tpu_custom_call.1} parent=1 // pred_check_branch
      %12 = sbr.rel (0) target = $region9
    $region8: #{tpu_custom_call.1} parent=1 // pred_region
      %s14 = ssub.s32 12288, 12288
      %15 = vsyncadd [#allocation3], %s14
      %s16 = sshll.u32 [#allocation2], 4
      %s17 = int_to_ptr.vmem [resolvable:$true] %s16
      %22 = dma.hbm_to_vmem [thread:$0]  %s1, 12288, %s17, [#allocation3], 768, 768, 48
    $region9: #{tpu_custom_call.1} parent=1 // pred_fallthru
      _
    // Predicated region
    $region10: #{tpu_custom_call.1} parent=1 // pred_check
      _
    $region11: #{tpu_custom_call.1} parent=1 // pred_check_branch
      %24 = sbr.rel (0) target = $region13
    $region12: #{tpu_custom_call.1} parent=1 // pred_region
      %25 = dma.done [#allocation3], 12288
    $region13: #{tpu_custom_call.1} parent=1 // pred_fallthru
      _
    %v26 = vld [vmem:[%s0] sm:$0xff]
    %v27 = vld [vmem:[%s0 + $0x8] sm:$0xff]
    %v28 = vlaneseq
    %v29 = vand.u32 %v28, 127
    %30 = vset.pattern.permute.xlu0 0
    %31 = vperm.xlu0 %30, %v26
    %v32 = vpop.permute.xlu0 %31
    %33 = vset.pattern.permute.xlu0 0
    %34 = vperm.xlu0 %33, %v27
    %v35 = vpop.permute.xlu0 %34
    %vm36 = vcmp.eq.s32.totalorder %v29, %v32
    %vm37 = vcmp.eq.s32.totalorder %v29, %v35
    %v38 = vsel %vm36, 1, 0
    %v39 = vsel %vm37, 1, 0
    %v40 = vcvt.s32.f32 %v38
    %v41 = vcvt.s32.f32 %v39
    %v42 = vld [vmem:[#allocation2] sm:$0xff]
    %v43 = vld [vmem:[#allocation2 + $0x8] sm:$0xff]
    %v44 = vld [vmem:[#allocation2 + $0x10] sm:$0xff]
    %v45 = vld [vmem:[#allocation2 + $0x18] sm:$0xff]
    %v46 = vld [vmem:[#allocation2 + $0x20] sm:$0xff]
    %v47 = vld [vmem:[#allocation2 + $0x28] sm:$0xff]
    %v48 = vld [vmem:[#allocation2 + $0x30] sm:$0xff]
    %v49 = vld [vmem:[#allocation2 + $0x38] sm:$0xff]
    %v50 = vld [vmem:[#allocation2 + $0x40] sm:$0xff]
    %v51 = vld [vmem:[#allocation2 + $0x48] sm:$0xff]
    %v52 = vld [vmem:[#allocation2 + $0x50] sm:$0xff]
    %v53 = vld [vmem:[#allocation2 + $0x58] sm:$0xff]
    %v54 = vld [vmem:[#allocation2 + $0x60] sm:$0xff]
    %v55 = vld [vmem:[#allocation2 + $0x68] sm:$0xff]
    %v56 = vld [vmem:[#allocation2 + $0x70] sm:$0xff]
    %v57 = vld [vmem:[#allocation2 + $0x78] sm:$0xff]
    %v58 = vld [vmem:[#allocation2 + $0x80] sm:$0xff]
    %v59 = vld [vmem:[#allocation2 + $0x88] sm:$0xff]
    %v60 = vld [vmem:[#allocation2 + $0x90] sm:$0xff]
    %v61 = vld [vmem:[#allocation2 + $0x98] sm:$0xff]
    %v62 = vld [vmem:[#allocation2 + $0xa0] sm:$0xff]
    %v63 = vld [vmem:[#allocation2 + $0xa8] sm:$0xff]
    %v64 = vld [vmem:[#allocation2 + $0xb0] sm:$0xff]
    %v65 = vld [vmem:[#allocation2 + $0xb8] sm:$0xff]
    %v66 = vld [vmem:[#allocation2 + $0xc0] sm:$0xff]
    %v67 = vld [vmem:[#allocation2 + $0xc8] sm:$0xff]
    %v68 = vld [vmem:[#allocation2 + $0xd0] sm:$0xff]
    %v69 = vld [vmem:[#allocation2 + $0xd8] sm:$0xff]
    %v70 = vld [vmem:[#allocation2 + $0xe0] sm:$0xff]
    %v71 = vld [vmem:[#allocation2 + $0xe8] sm:$0xff]
    %v72 = vld [vmem:[#allocation2 + $0xf0] sm:$0xff]
    %v73 = vld [vmem:[#allocation2 + $0xf8] sm:$0xff]
    %v74 = vld [vmem:[#allocation2 + $0x100] sm:$0xff]
    %v75 = vld [vmem:[#allocation2 + $0x108] sm:$0xff]
    %v76 = vld [vmem:[#allocation2 + $0x110] sm:$0xff]
    %v77 = vld [vmem:[#allocation2 + $0x118] sm:$0xff]
    %v78 = vld [vmem:[#allocation2 + $0x120] sm:$0xff]
    %v79 = vld [vmem:[#allocation2 + $0x128] sm:$0xff]
    %v80 = vld [vmem:[#allocation2 + $0x130] sm:$0xff]
    %v81 = vld [vmem:[#allocation2 + $0x138] sm:$0xff]
    %v82 = vld [vmem:[#allocation2 + $0x140] sm:$0xff]
    %v83 = vld [vmem:[#allocation2 + $0x148] sm:$0xff]
    %v84 = vld [vmem:[#allocation2 + $0x150] sm:$0xff]
    %v85 = vld [vmem:[#allocation2 + $0x158] sm:$0xff]
    %v86 = vld [vmem:[#allocation2 + $0x160] sm:$0xff]
    %v87 = vld [vmem:[#allocation2 + $0x168] sm:$0xff]
    %v88 = vld [vmem:[#allocation2 + $0x170] sm:$0xff]
    %v89 = vld [vmem:[#allocation2 + $0x178] sm:$0xff]
    %v90 = vld [vmem:[#allocation2 + $0x180] sm:$0xff]
    %v91 = vld [vmem:[#allocation2 + $0x188] sm:$0xff]
    %v92 = vld [vmem:[#allocation2 + $0x190] sm:$0xff]
    %v93 = vld [vmem:[#allocation2 + $0x198] sm:$0xff]
    %v94 = vld [vmem:[#allocation2 + $0x1a0] sm:$0xff]
    %v95 = vld [vmem:[#allocation2 + $0x1a8] sm:$0xff]
    %v96 = vld [vmem:[#allocation2 + $0x1b0] sm:$0xff]
    %v97 = vld [vmem:[#allocation2 + $0x1b8] sm:$0xff]
    %v98 = vld [vmem:[#allocation2 + $0x1c0] sm:$0xff]
    %v99 = vld [vmem:[#allocation2 + $0x1c8] sm:$0xff]
    %v100 = vld [vmem:[#allocation2 + $0x1d0] sm:$0xff]
    %v101 = vld [vmem:[#allocation2 + $0x1d8] sm:$0xff]
    %v102 = vld [vmem:[#allocation2 + $0x1e0] sm:$0xff]
    %v103 = vld [vmem:[#allocation2 + $0x1e8] sm:$0xff]
    %v104 = vld [vmem:[#allocation2 + $0x1f0] sm:$0xff]
    %v105 = vld [vmem:[#allocation2 + $0x1f8] sm:$0xff]
    %v106 = vld [vmem:[#allocation2 + $0x200] sm:$0xff]
    %v107 = vld [vmem:[#allocation2 + $0x208] sm:$0xff]
    %v108 = vld [vmem:[#allocation2 + $0x210] sm:$0xff]
    %v109 = vld [vmem:[#allocation2 + $0x218] sm:$0xff]
    %v110 = vld [vmem:[#allocation2 + $0x220] sm:$0xff]
    %v111 = vld [vmem:[#allocation2 + $0x228] sm:$0xff]
    %v112 = vld [vmem:[#allocation2 + $0x230] sm:$0xff]
    %v113 = vld [vmem:[#allocation2 + $0x238] sm:$0xff]
    %v114 = vld [vmem:[#allocation2 + $0x240] sm:$0xff]
    %v115 = vld [vmem:[#allocation2 + $0x248] sm:$0xff]
    %v116 = vld [vmem:[#allocation2 + $0x250] sm:$0xff]
    %v117 = vld [vmem:[#allocation2 + $0x258] sm:$0xff]
    %v118 = vld [vmem:[#allocation2 + $0x260] sm:$0xff]
    %v119 = vld [vmem:[#allocation2 + $0x268] sm:$0xff]
    %v120 = vld [vmem:[#allocation2 + $0x270] sm:$0xff]
    %v121 = vld [vmem:[#allocation2 + $0x278] sm:$0xff]
    %v122 = vld [vmem:[#allocation2 + $0x280] sm:$0xff]
    %v123 = vld [vmem:[#allocation2 + $0x288] sm:$0xff]
    %v124 = vld [vmem:[#allocation2 + $0x290] sm:$0xff]
    %v125 = vld [vmem:[#allocation2 + $0x298] sm:$0xff]
    %v126 = vld [vmem:[#allocation2 + $0x2a0] sm:$0xff]
    %v127 = vld [vmem:[#allocation2 + $0x2a8] sm:$0xff]
    %v128 = vld [vmem:[#allocation2 + $0x2b0] sm:$0xff]
    %v129 = vld [vmem:[#allocation2 + $0x2b8] sm:$0xff]
    %v130 = vld [vmem:[#allocation2 + $0x2c0] sm:$0xff]
    %v131 = vld [vmem:[#allocation2 + $0x2c8] sm:$0xff]
    %v132 = vld [vmem:[#allocation2 + $0x2d0] sm:$0xff]
    %v133 = vld [vmem:[#allocation2 + $0x2d8] sm:$0xff]
    %v134 = vld [vmem:[#allocation2 + $0x2e0] sm:$0xff]
    %v135 = vld [vmem:[#allocation2 + $0x2e8] sm:$0xff]
    %v136 = vld [vmem:[#allocation2 + $0x2f0] sm:$0xff]
    %v137 = vld [vmem:[#allocation2 + $0x2f8] sm:$0xff]
    %v138 = vand.u32 %v133, 4294901760
    %139 = vmatprep.subr.mxu0 %v138
    %v140 = vand.u32 %v132, 4294901760
    %141 = vmatpush1.msra.mxu0 %v140
    %v142 = vand.u32 %v127, 4294901760
    %143 = vmatprep.subr.mxu0 %v142
    %v144 = vand.u32 %v126, 4294901760
    %145 = vmatpush1.msra.mxu0 %v144
    %v146 = vand.u32 %v121, 4294901760
    %147 = vmatprep.subr.mxu0 %v146
    %v148 = vand.u32 %v120, 4294901760
    %149 = vmatpush1.msra.mxu0 %v148
    %v150 = vand.u32 %v115, 4294901760
    %151 = vmatprep.subr.mxu0 %v150
    %v152 = vand.u32 %v114, 4294901760
    %153 = vmatpush1.msra.mxu0 %v152
    %v154 = vand.u32 %v109, 4294901760
    %155 = vmatprep.subr.mxu0 %v154
    %v156 = vand.u32 %v108, 4294901760
    %157 = vmatpush1.msra.mxu0 %v156
    %v158 = vand.u32 %v103, 4294901760
    %159 = vmatprep.subr.mxu0 %v158
    %v160 = vand.u32 %v102, 4294901760
    %161 = vmatpush1.msra.mxu0 %v160
    %v162 = vand.u32 %v97, 4294901760
    %163 = vmatprep.subr.mxu0 %v162
    %v164 = vand.u32 %v96, 4294901760
    %165 = vmatpush1.msra.mxu0 %v164
    %v166 = vand.u32 %v91, 4294901760
    %167 = vmatprep.subr.mxu0 %v166
    %v168 = vand.u32 %v90, 4294901760
    %169 = vmatpush1.msra.mxu0 %v168
    %v170 = vand.u32 %v85, 4294901760
    %171 = vmatprep.subr.mxu0 %v170
    %v172 = vand.u32 %v84, 4294901760
    %173 = vmatpush1.msra.mxu0 %v172
    %v174 = vand.u32 %v79, 4294901760
    %175 = vmatprep.subr.mxu0 %v174
    %v176 = vand.u32 %v78, 4294901760
    %177 = vmatpush1.msra.mxu0 %v176
    %v178 = vand.u32 %v73, 4294901760
    %179 = vmatprep.subr.mxu0 %v178
    %v180 = vand.u32 %v72, 4294901760
    %181 = vmatpush1.msra.mxu0 %v180
    %v182 = vand.u32 %v67, 4294901760
    %183 = vmatprep.subr.mxu0 %v182
    %v184 = vand.u32 %v66, 4294901760
    %185 = vmatpush1.msra.mxu0 %v184
    %v186 = vand.u32 %v61, 4294901760
    %187 = vmatprep.subr.mxu0 %v186
    %v188 = vand.u32 %v60, 4294901760
    %189 = vmatpush1.msra.mxu0 %v188
    %v190 = vand.u32 %v55, 4294901760
    %191 = vmatprep.subr.mxu0 %v190
    %v192 = vand.u32 %v54, 4294901760
    %193 = vmatpush1.msra.mxu0 %v192
    %v194 = vand.u32 %v49, 4294901760
    %195 = vmatprep.subr.mxu0 %v194
    %v196 = vand.u32 %v48, 4294901760
    %197 = vmatpush1.msra.mxu0 %v196
    %v198 = vand.u32 %v43, 4294901760
    %199 = vmatprep.subr.mxu0 %v198
    %v200 = vand.u32 %v42, 4294901760
    %201 = vmatpush1.msra.mxu0 %v200
    %202 = vmatprep.subr.mxu0 0.0
    %203 = vmatpush2.msra.mxu0 0.0
    %204 = vmatprep.subr.mxu0 0.0
    %205 = vmatpush2.msra.mxu0 0.0
    %206 = vmatprep.subr.mxu0 0.0
    %207 = vmatpush2.msra.mxu0 0.0
    %208 = vmatprep.subr.mxu0 0.0
    %209 = vmatpush2.msra.mxu0 0.0
    %210 = vmatprep.subr.mxu0 0.0
    %211 = vmatpush2.msra.mxu0 0.0
    %212 = vmatprep.subr.mxu0 0.0
    %213 = vmatpush2.msra.mxu0 0.0
    %214 = vmatprep.subr.mxu0 0.0
    %215 = vmatpush2.msra.mxu0 0.0
    %216 = vmatprep.subr.mxu0 0.0
    %217 = vmatpush2.msra.mxu0 0.0
    %218 = vmatprep.subr.mxu0 0.0
    %219 = vmatpush2.msra.mxu0 0.0
    %220 = vmatprep.subr.mxu0 0.0
    %221 = vmatpush2.msra.mxu0 0.0
    %222 = vmatprep.subr.mxu0 0.0
    %223 = vmatpush2.msra.mxu0 0.0
    %224 = vmatprep.subr.mxu0 0.0
    %225 = vmatpush2.msra.mxu0 0.0
    %226 = vmatprep.subr.mxu0 0.0
    %227 = vmatpush2.msra.mxu0 0.0
    %228 = vmatprep.subr.mxu0 0.0
    %229 = vmatpush2.msra.mxu0 0.0
    %230 = vmatprep.subr.mxu0 0.0
    %231 = vmatpush2.msra.mxu0 0.0
    %232 = vmatprep.subr.mxu0 0.0
    %233 = vmatpush2.msra.mxu0 0.0
    %234 = vmatprep.mubr.f32.mxu0 0.0
    %v235 = vand.u32 %v40, 4294901760
    %v236 = vsub.f32 %v40, %v235
    %v237 = vand.u32 %v236, 4294901760
    %v238 = vsub.f32 %v236, %v237
    %v239 = vand.u32 %v238, 4294901760
    %240 = vmatmul.mubr.f32.gmra.mxu0 %v239
    %v241 = vpop.f32.mrf.mxu0
    %v242 = vadd.f32 0.0, %v241
    %v243 = vpop.f32.mrf.mxu0
    %v244 = vadd.f32 0.0, %v243
    %245 = vmatprep.mubr.f32.mxu0 0.0
    %v246 = vand.u32 %v41, 4294901760
    %v247 = vsub.f32 %v41, %v246
    %v248 = vand.u32 %v247, 4294901760
    %v249 = vsub.f32 %v247, %v248
    %v250 = vand.u32 %v249, 4294901760
    %251 = vmatmul.mubr.f32.gmra.mxu0 %v250
    %v252 = vpop.f32.mrf.mxu0
    %v253 = vadd.f32 0.0, %v252
    %v254 = vpop.f32.mrf.mxu0
    %v255 = vadd.f32 0.0, %v254
    %256 = vdwg.mxu0
    %v257 = vand.u32 %v133, 4294901760
    %v258 = vsub.f32 %v133, %v257
    %v259 = vand.u32 %v258, 4294901760
    %v260 = vsub.f32 %v258, %v259
    %v261 = vand.u32 %v260, 4294901760
    %262 = vmatprep.subr.mxu0 %v261
    %v263 = vand.u32 %v132, 4294901760
    %v264 = vsub.f32 %v132, %v263
    %v265 = vand.u32 %v264, 4294901760
    %v266 = vsub.f32 %v264, %v265
    %v267 = vand.u32 %v266, 4294901760
    %268 = vmatpush1.msra.mxu0 %v267
    %v269 = vand.u32 %v127, 4294901760
    %v270 = vsub.f32 %v127, %v269
    %v271 = vand.u32 %v270, 4294901760
    %v272 = vsub.f32 %v270, %v271
    %v273 = vand.u32 %v272, 4294901760
    %274 = vmatprep.subr.mxu0 %v273
    %v275 = vand.u32 %v126, 4294901760
    %v276 = vsub.f32 %v126, %v275
    %v277 = vand.u32 %v276, 4294901760
    %v278 = vsub.f32 %v276, %v277
    %v279 = vand.u32 %v278, 4294901760
    %280 = vmatpush1.msra.mxu0 %v279
    %v281 = vand.u32 %v121, 4294901760
    %v282 = vsub.f32 %v121, %v281
    %v283 = vand.u32 %v282, 4294901760
    %v284 = vsub.f32 %v282, %v283
    %v285 = vand.u32 %v284, 4294901760
    %286 = vmatprep.subr.mxu0 %v285
    %v287 = vand.u32 %v120, 4294901760
    %v288 = vsub.f32 %v120, %v287
    %v289 = vand.u32 %v288, 4294901760
    %v290 = vsub.f32 %v288, %v289
    %v291 = vand.u32 %v290, 4294901760
    %292 = vmatpush1.msra.mxu0 %v291
    %v293 = vand.u32 %v115, 4294901760
    %v294 = vsub.f32 %v115, %v293
    %v295 = vand.u32 %v294, 4294901760
    %v296 = vsub.f32 %v294, %v295
    %v297 = vand.u32 %v296, 4294901760
    %298 = vmatprep.subr.mxu0 %v297
    %v299 = vand.u32 %v114, 4294901760
    %v300 = vsub.f32 %v114, %v299
    %v301 = vand.u32 %v300, 4294901760
    %v302 = vsub.f32 %v300, %v301
    %v303 = vand.u32 %v302, 4294901760
    %304 = vmatpush1.msra.mxu0 %v303
    %v305 = vand.u32 %v109, 4294901760
    %v306 = vsub.f32 %v109, %v305
    %v307 = vand.u32 %v306, 4294901760
    %v308 = vsub.f32 %v306, %v307
    %v309 = vand.u32 %v308, 4294901760
    %310 = vmatprep.subr.mxu0 %v309
    %v311 = vand.u32 %v108, 4294901760
    %v312 = vsub.f32 %v108, %v311
    %v313 = vand.u32 %v312, 4294901760
    %v314 = vsub.f32 %v312, %v313
    %v315 = vand.u32 %v314, 4294901760
    %316 = vmatpush1.msra.mxu0 %v315
    %v317 = vand.u32 %v103, 4294901760
    %v318 = vsub.f32 %v103, %v317
    %v319 = vand.u32 %v318, 4294901760
    %v320 = vsub.f32 %v318, %v319
    %v321 = vand.u32 %v320, 4294901760
    %322 = vmatprep.subr.mxu0 %v321
    %v323 = vand.u32 %v102, 4294901760
    %v324 = vsub.f32 %v102, %v323
    %v325 = vand.u32 %v324, 4294901760
    %v326 = vsub.f32 %v324, %v325
    %v327 = vand.u32 %v326, 4294901760
    %328 = vmatpush1.msra.mxu0 %v327
    %v329 = vand.u32 %v97, 4294901760
    %v330 = vsub.f32 %v97, %v329
    %v331 = vand.u32 %v330, 4294901760
    %v332 = vsub.f32 %v330, %v331
    %v333 = vand.u32 %v332, 4294901760
    %334 = vmatprep.subr.mxu0 %v333
    %v335 = vand.u32 %v96, 4294901760
    %v336 = vsub.f32 %v96, %v335
    %v337 = vand.u32 %v336, 4294901760
    %v338 = vsub.f32 %v336, %v337
    %v339 = vand.u32 %v338, 4294901760
    %340 = vmatpush1.msra.mxu0 %v339
    %v341 = vand.u32 %v91, 4294901760
    %v342 = vsub.f32 %v91, %v341
    %v343 = vand.u32 %v342, 4294901760
    %v344 = vsub.f32 %v342, %v343
    %v345 = vand.u32 %v344, 4294901760
    %346 = vmatprep.subr.mxu0 %v345
    %v347 = vand.u32 %v90, 4294901760
    %v348 = vsub.f32 %v90, %v347
    %v349 = vand.u32 %v348, 4294901760
    %v350 = vsub.f32 %v348, %v349
    %v351 = vand.u32 %v350, 4294901760
    %352 = vmatpush1.msra.mxu0 %v351
    %v353 = vand.u32 %v85, 4294901760
    %v354 = vsub.f32 %v85, %v353
    %v355 = vand.u32 %v354, 4294901760
    %v356 = vsub.f32 %v354, %v355
    %v357 = vand.u32 %v356, 4294901760
    %358 = vmatprep.subr.mxu0 %v357
    %v359 = vand.u32 %v84, 4294901760
    %v360 = vsub.f32 %v84, %v359
    %v361 = vand.u32 %v360, 4294901760
    %v362 = vsub.f32 %v360, %v361
    %v363 = vand.u32 %v362, 4294901760
    %364 = vmatpush1.msra.mxu0 %v363
    %v365 = vand.u32 %v79, 4294901760
    %v366 = vsub.f32 %v79, %v365
    %v367 = vand.u32 %v366, 4294901760
    %v368 = vsub.f32 %v366, %v367
    %v369 = vand.u32 %v368, 4294901760
    %370 = vmatprep.subr.mxu0 %v369
    %v371 = vand.u32 %v78, 4294901760
    %v372 = vsub.f32 %v78, %v371
    %v373 = vand.u32 %v372, 4294901760
    %v374 = vsub.f32 %v372, %v373
    %v375 = vand.u32 %v374, 4294901760
    %376 = vmatpush1.msra.mxu0 %v375
    %v377 = vand.u32 %v73, 4294901760
    %v378 = vsub.f32 %v73, %v377
    %v379 = vand.u32 %v378, 4294901760
    %v380 = vsub.f32 %v378, %v379
    %v381 = vand.u32 %v380, 4294901760
    %382 = vmatprep.subr.mxu0 %v381
    %v383 = vand.u32 %v72, 4294901760
    %v384 = vsub.f32 %v72, %v383
    %v385 = vand.u32 %v384, 4294901760
    %v386 = vsub.f32 %v384, %v385
    %v387 = vand.u32 %v386, 4294901760
    %388 = vmatpush1.msra.mxu0 %v387
    %v389 = vand.u32 %v67, 4294901760
    %v390 = vsub.f32 %v67, %v389
    %v391 = vand.u32 %v390, 4294901760
    %v392 = vsub.f32 %v390, %v391
    %v393 = vand.u32 %v392, 4294901760
    %394 = vmatprep.subr.mxu0 %v393
    %v395 = vand.u32 %v66, 4294901760
    %v396 = vsub.f32 %v66, %v395
    %v397 = vand.u32 %v396, 4294901760
    %v398 = vsub.f32 %v396, %v397
    %v399 = vand.u32 %v398, 4294901760
    %400 = vmatpush1.msra.mxu0 %v399
    %v401 = vand.u32 %v61, 4294901760
    %v402 = vsub.f32 %v61, %v401
    %v403 = vand.u32 %v402, 4294901760
    %v404 = vsub.f32 %v402, %v403
    %v405 = vand.u32 %v404, 4294901760
    %406 = vmatprep.subr.mxu0 %v405
    %v407 = vand.u32 %v60, 4294901760
    %v408 = vsub.f32 %v60, %v407
    %v409 = vand.u32 %v408, 4294901760
    %v410 = vsub.f32 %v408, %v409
    %v411 = vand.u32 %v410, 4294901760
    %412 = vmatpush1.msra.mxu0 %v411
    %v413 = vand.u32 %v55, 4294901760
    %v414 = vsub.f32 %v55, %v413
    %v415 = vand.u32 %v414, 4294901760
    %v416 = vsub.f32 %v414, %v415
    %v417 = vand.u32 %v416, 4294901760
    %418 = vmatprep.subr.mxu0 %v417
    %v419 = vand.u32 %v54, 4294901760
    %v420 = vsub.f32 %v54, %v419
    %v421 = vand.u32 %v420, 4294901760
    %v422 = vsub.f32 %v420, %v421
    %v423 = vand.u32 %v422, 4294901760
    %424 = vmatpush1.msra.mxu0 %v423
    %v425 = vand.u32 %v49, 4294901760
    %v426 = vsub.f32 %v49, %v425
    %v427 = vand.u32 %v426, 4294901760
    %v428 = vsub.f32 %v426, %v427
    %v429 = vand.u32 %v428, 4294901760
    %430 = vmatprep.subr.mxu0 %v429
    %v431 = vand.u32 %v48, 4294901760
    %v432 = vsub.f32 %v48, %v431
    %v433 = vand.u32 %v432, 4294901760
    %v434 = vsub.f32 %v432, %v433
    %v435 = vand.u32 %v434, 4294901760
    %436 = vmatpush1.msra.mxu0 %v435
    %v437 = vand.u32 %v43, 4294901760
    %v438 = vsub.f32 %v43, %v437
    %v439 = vand.u32 %v438, 4294901760
    %v440 = vsub.f32 %v438, %v439
    %v441 = vand.u32 %v440, 4294901760
    %442 = vmatprep.subr.mxu0 %v441
    %v443 = vand.u32 %v42, 4294901760
    %v444 = vsub.f32 %v42, %v443
    %v445 = vand.u32 %v444, 4294901760
    %v446 = vsub.f32 %v444, %v445
    %v447 = vand.u32 %v446, 4294901760
    %448 = vmatpush1.msra.mxu0 %v447
    %449 = vmatprep.subr.mxu0 0.0
    %450 = vmatpush2.msra.mxu0 0.0
    %451 = vmatprep.subr.mxu0 0.0
    %452 = vmatpush2.msra.mxu0 0.0
    %453 = vmatprep.subr.mxu0 0.0
    %454 = vmatpush2.msra.mxu0 0.0
    %455 = vmatprep.subr.mxu0 0.0
    %456 = vmatpush2.msra.mxu0 0.0
    %457 = vmatprep.subr.mxu0 0.0
    %458 = vmatpush2.msra.mxu0 0.0
    %459 = vmatprep.subr.mxu0 0.0
    %460 = vmatpush2.msra.mxu0 0.0
    %461 = vmatprep.subr.mxu0 0.0
    %462 = vmatpush2.msra.mxu0 0.0
    %463 = vmatprep.subr.mxu0 0.0
    %464 = vmatpush2.msra.mxu0 0.0
    %465 = vmatprep.subr.mxu0 0.0
    %466 = vmatpush2.msra.mxu0 0.0
    %467 = vmatprep.subr.mxu0 0.0
    %468 = vmatpush2.msra.mxu0 0.0
    %469 = vmatprep.subr.mxu0 0.0
    %470 = vmatpush2.msra.mxu0 0.0
    %471 = vmatprep.subr.mxu0 0.0
    %472 = vmatpush2.msra.mxu0 0.0
    %473 = vmatprep.subr.mxu0 0.0
    %474 = vmatpush2.msra.mxu0 0.0
    %475 = vmatprep.subr.mxu0 0.0
    %476 = vmatpush2.msra.mxu0 0.0
    %477 = vmatprep.subr.mxu0 0.0
    %478 = vmatpush2.msra.mxu0 0.0
    %479 = vmatprep.subr.mxu0 0.0
    %480 = vmatpush2.msra.mxu0 0.0
    %481 = vmatprep.mubr.f32.mxu0 0.0
    %v482 = vand.u32 %v40, 4294901760
    %483 = vmatmul.mubr.f32.gmra.mxu0 %v482
    %v484 = vpop.f32.mrf.mxu0
    %v485 = vadd.f32 %v242, %v484
    %v486 = vpop.f32.mrf.mxu0
    %v487 = vadd.f32 %v244, %v486
    %488 = vmatprep.mubr.f32.mxu0 0.0
    %v489 = vand.u32 %v41, 4294901760
    %490 = vmatmul.mubr.f32.gmra.mxu0 %v489
    %v491 = vpop.f32.mrf.mxu0
    %v492 = vadd.f32 %v253, %v491
    %v493 = vpop.f32.mrf.mxu0
    %v494 = vadd.f32 %v255, %v493
    %495 = vdwg.mxu0
    %v496 = vand.u32 %v133, 4294901760
    %v497 = vsub.f32 %v133, %v496
    %498 = vmatprep.subr.mxu0 %v497
    %v499 = vand.u32 %v132, 4294901760
    %v500 = vsub.f32 %v132, %v499
    %501 = vmatpush1.msra.mxu0 %v500
    %v502 = vand.u32 %v127, 4294901760
    %v503 = vsub.f32 %v127, %v502
    %504 = vmatprep.subr.mxu0 %v503
    %v505 = vand.u32 %v126, 4294901760
    %v506 = vsub.f32 %v126, %v505
    %507 = vmatpush1.msra.mxu0 %v506
    %v508 = vand.u32 %v121, 4294901760
    %v509 = vsub.f32 %v121, %v508
    %510 = vmatprep.subr.mxu0 %v509
    %v511 = vand.u32 %v120, 4294901760
    %v512 = vsub.f32 %v120, %v511
    %513 = vmatpush1.msra.mxu0 %v512
    %v514 = vand.u32 %v115, 4294901760
    %v515 = vsub.f32 %v115, %v514
    %516 = vmatprep.subr.mxu0 %v515
    %v517 = vand.u32 %v114, 4294901760
    %v518 = vsub.f32 %v114, %v517
    %519 = vmatpush1.msra.mxu0 %v518
    %v520 = vand.u32 %v109, 4294901760
    %v521 = vsub.f32 %v109, %v520
    %522 = vmatprep.subr.mxu0 %v521
    %v523 = vand.u32 %v108, 4294901760
    %v524 = vsub.f32 %v108, %v523
    %525 = vmatpush1.msra.mxu0 %v524
    %v526 = vand.u32 %v103, 4294901760
    %v527 = vsub.f32 %v103, %v526
    %528 = vmatprep.subr.mxu0 %v527
    %v529 = vand.u32 %v102, 4294901760
    %v530 = vsub.f32 %v102, %v529
    %531 = vmatpush1.msra.mxu0 %v530
    %v532 = vand.u32 %v97, 4294901760
    %v533 = vsub.f32 %v97, %v532
    %534 = vmatprep.subr.mxu0 %v533
    %v535 = vand.u32 %v96, 4294901760
    %v536 = vsub.f32 %v96, %v535
    %537 = vmatpush1.msra.mxu0 %v536
    %v538 = vand.u32 %v91, 4294901760
    %v539 = vsub.f32 %v91, %v538
    %540 = vmatprep.subr.mxu0 %v539
    %v541 = vand.u32 %v90, 4294901760
    %v542 = vsub.f32 %v90, %v541
    %543 = vmatpush1.msra.mxu0 %v542
    %v544 = vand.u32 %v85, 4294901760
    %v545 = vsub.f32 %v85, %v544
    %546 = vmatprep.subr.mxu0 %v545
    %v547 = vand.u32 %v84, 4294901760
    %v548 = vsub.f32 %v84, %v547
    %549 = vmatpush1.msra.mxu0 %v548
    %v550 = vand.u32 %v79, 4294901760
    %v551 = vsub.f32 %v79, %v550
    %552 = vmatprep.subr.mxu0 %v551
    %v553 = vand.u32 %v78, 4294901760
    %v554 = vsub.f32 %v78, %v553
    %555 = vmatpush1.msra.mxu0 %v554
    %v556 = vand.u32 %v73, 4294901760
    %v557 = vsub.f32 %v73, %v556
    %558 = vmatprep.subr.mxu0 %v557
    %v559 = vand.u32 %v72, 4294901760
    %v560 = vsub.f32 %v72, %v559
    %561 = vmatpush1.msra.mxu0 %v560
    %v562 = vand.u32 %v67, 4294901760
    %v563 = vsub.f32 %v67, %v562
    %564 = vmatprep.subr.mxu0 %v563
    %v565 = vand.u32 %v66, 4294901760
    %v566 = vsub.f32 %v66, %v565
    %567 = vmatpush1.msra.mxu0 %v566
    %v568 = vand.u32 %v61, 4294901760
    %v569 = vsub.f32 %v61, %v568
    %570 = vmatprep.subr.mxu0 %v569
    %v571 = vand.u32 %v60, 4294901760
    %v572 = vsub.f32 %v60, %v571
    %573 = vmatpush1.msra.mxu0 %v572
    %v574 = vand.u32 %v55, 4294901760
    %v575 = vsub.f32 %v55, %v574
    %576 = vmatprep.subr.mxu0 %v575
    %v577 = vand.u32 %v54, 4294901760
    %v578 = vsub.f32 %v54, %v577
    %579 = vmatpush1.msra.mxu0 %v578
    %v580 = vand.u32 %v49, 4294901760
    %v581 = vsub.f32 %v49, %v580
    %582 = vmatprep.subr.mxu0 %v581
    %v583 = vand.u32 %v48, 4294901760
    %v584 = vsub.f32 %v48, %v583
    %585 = vmatpush1.msra.mxu0 %v584
    %v586 = vand.u32 %v43, 4294901760
    %v587 = vsub.f32 %v43, %v586
    %588 = vmatprep.subr.mxu0 %v587
    %v589 = vand.u32 %v42, 4294901760
    %v590 = vsub.f32 %v42, %v589
    %591 = vmatpush1.msra.mxu0 %v590
    %592 = vmatprep.subr.mxu0 0.0
    %593 = vmatpush2.msra.mxu0 0.0
    %594 = vmatprep.subr.mxu0 0.0
    %595 = vmatpush2.msra.mxu0 0.0
    %596 = vmatprep.subr.mxu0 0.0
    %597 = vmatpush2.msra.mxu0 0.0
    %598 = vmatprep.subr.mxu0 0.0
    %599 = vmatpush2.msra.mxu0 0.0
    %600 = vmatprep.subr.mxu0 0.0
    %601 = vmatpush2.msra.mxu0 0.0
    %602 = vmatprep.subr.mxu0 0.0
    %603 = vmatpush2.msra.mxu0 0.0
    %604 = vmatprep.subr.mxu0 0.0
    %605 = vmatpush2.msra.mxu0 0.0
    %606 = vmatprep.subr.mxu0 0.0
    %607 = vmatpush2.msra.mxu0 0.0
    %608 = vmatprep.subr.mxu0 0.0
    %609 = vmatpush2.msra.mxu0 0.0
    %610 = vmatprep.subr.mxu0 0.0
    %611 = vmatpush2.msra.mxu0 0.0
    %612 = vmatprep.subr.mxu0 0.0
    %613 = vmatpush2.msra.mxu0 0.0
    %614 = vmatprep.subr.mxu0 0.0
    %615 = vmatpush2.msra.mxu0 0.0
    %616 = vmatprep.subr.mxu0 0.0
    %617 = vmatpush2.msra.mxu0 0.0
    %618 = vmatprep.subr.mxu0 0.0
    %619 = vmatpush2.msra.mxu0 0.0
    %620 = vmatprep.subr.mxu0 0.0
    %621 = vmatpush2.msra.mxu0 0.0
    %622 = vmatprep.subr.mxu0 0.0
    %623 = vmatpush2.msra.mxu0 0.0
    %624 = vmatprep.mubr.f32.mxu0 0.0
    %v625 = vand.u32 %v40, 4294901760
    %v626 = vsub.f32 %v40, %v625
    %627 = vmatmul.mubr.f32.gmra.mxu0 %v626
    %v628 = vpop.f32.mrf.mxu0
    %v629 = vadd.f32 %v485, %v628
    %v630 = vpop.f32.mrf.mxu0
    %v631 = vadd.f32 %v487, %v630
    %632 = vmatprep.mubr.f32.mxu0 0.0
    %v633 = vand.u32 %v41, 4294901760
    %v634 = vsub.f32 %v41, %v633
    %635 = vmatmul.mubr.f32.gmra.mxu0 %v634
    %v636 = vpop.f32.mrf.mxu0
    %v637 = vadd.f32 %v492, %v636
    %v638 = vpop.f32.mrf.mxu0
    %v639 = vadd.f32 %v494, %v638
    %640 = vdwg.mxu0
    %v641 = vand.u32 %v133, 4294901760
    %642 = vmatprep.subr.mxu0 %v641
    %v643 = vand.u32 %v132, 4294901760
    %644 = vmatpush1.msra.mxu0 %v643
    %v645 = vand.u32 %v127, 4294901760
    %646 = vmatprep.subr.mxu0 %v645
    %v647 = vand.u32 %v126, 4294901760
    %648 = vmatpush1.msra.mxu0 %v647
    %v649 = vand.u32 %v121, 4294901760
    %650 = vmatprep.subr.mxu0 %v649
    %v651 = vand.u32 %v120, 4294901760
    %652 = vmatpush1.msra.mxu0 %v651
    %v653 = vand.u32 %v115, 4294901760
    %654 = vmatprep.subr.mxu0 %v653
    %v655 = vand.u32 %v114, 4294901760
    %656 = vmatpush1.msra.mxu0 %v655
    %v657 = vand.u32 %v109, 4294901760
    %658 = vmatprep.subr.mxu0 %v657
    %v659 = vand.u32 %v108, 4294901760
    %660 = vmatpush1.msra.mxu0 %v659
    %v661 = vand.u32 %v103, 4294901760
    %662 = vmatprep.subr.mxu0 %v661
    %v663 = vand.u32 %v102, 4294901760
    %664 = vmatpush1.msra.mxu0 %v663
    %v665 = vand.u32 %v97, 4294901760
    %666 = vmatprep.subr.mxu0 %v665
    %v667 = vand.u32 %v96, 4294901760
    %668 = vmatpush1.msra.mxu0 %v667
    %v669 = vand.u32 %v91, 4294901760
    %670 = vmatprep.subr.mxu0 %v669
    %v671 = vand.u32 %v90, 4294901760
    %672 = vmatpush1.msra.mxu0 %v671
    %v673 = vand.u32 %v85, 4294901760
    %674 = vmatprep.subr.mxu0 %v673
    %v675 = vand.u32 %v84, 4294901760
    %676 = vmatpush1.msra.mxu0 %v675
    %v677 = vand.u32 %v79, 4294901760
    %678 = vmatprep.subr.mxu0 %v677
    %v679 = vand.u32 %v78, 4294901760
    %680 = vmatpush1.msra.mxu0 %v679
    %v681 = vand.u32 %v73, 4294901760
    %682 = vmatprep.subr.mxu0 %v681
    %v683 = vand.u32 %v72, 4294901760
    %684 = vmatpush1.msra.mxu0 %v683
    %v685 = vand.u32 %v67, 4294901760
    %686 = vmatprep.subr.mxu0 %v685
    %v687 = vand.u32 %v66, 4294901760
    %688 = vmatpush1.msra.mxu0 %v687
    %v689 = vand.u32 %v61, 4294901760
    %690 = vmatprep.subr.mxu0 %v689
    %v691 = vand.u32 %v60, 4294901760
    %692 = vmatpush1.msra.mxu0 %v691
    %v693 = vand.u32 %v55, 4294901760
    %694 = vmatprep.subr.mxu0 %v693
    %v695 = vand.u32 %v54, 4294901760
    %696 = vmatpush1.msra.mxu0 %v695
    %v697 = vand.u32 %v49, 4294901760
    %698 = vmatprep.subr.mxu0 %v697
    %v699 = vand.u32 %v48, 4294901760
    %700 = vmatpush1.msra.mxu0 %v699
    %v701 = vand.u32 %v43, 4294901760
    %702 = vmatprep.subr.mxu0 %v701
    %v703 = vand.u32 %v42, 4294901760
    %704 = vmatpush1.msra.mxu0 %v703
    %705 = vmatprep.subr.mxu0 0.0
    %706 = vmatpush2.msra.mxu0 0.0
    %707 = vmatprep.subr.mxu0 0.0
    %708 = vmatpush2.msra.mxu0 0.0
    %709 = vmatprep.subr.mxu0 0.0
    %710 = vmatpush2.msra.mxu0 0.0
    %711 = vmatprep.subr.mxu0 0.0
    %712 = vmatpush2.msra.mxu0 0.0
    %713 = vmatprep.subr.mxu0 0.0
    %714 = vmatpush2.msra.mxu0 0.0
    %715 = vmatprep.subr.mxu0 0.0
    %716 = vmatpush2.msra.mxu0 0.0
    %717 = vmatprep.subr.mxu0 0.0
    %718 = vmatpush2.msra.mxu0 0.0
    %719 = vmatprep.subr.mxu0 0.0
    %720 = vmatpush2.msra.mxu0 0.0
    %721 = vmatprep.subr.mxu0 0.0
    %722 = vmatpush2.msra.mxu0 0.0
    %723 = vmatprep.subr.mxu0 0.0
    %724 = vmatpush2.msra.mxu0 0.0
    %725 = vmatprep.subr.mxu0 0.0
    %726 = vmatpush2.msra.mxu0 0.0
    %727 = vmatprep.subr.mxu0 0.0
    %728 = vmatpush2.msra.mxu0 0.0
    %729 = vmatprep.subr.mxu0 0.0
    %730 = vmatpush2.msra.mxu0 0.0
    %731 = vmatprep.subr.mxu0 0.0
    %732 = vmatpush2.msra.mxu0 0.0
    %733 = vmatprep.subr.mxu0 0.0
    %734 = vmatpush2.msra.mxu0 0.0
    %735 = vmatprep.subr.mxu0 0.0
    %736 = vmatpush2.msra.mxu0 0.0
    %737 = vmatprep.mubr.f32.mxu0 0.0
    %v738 = vand.u32 %v40, 4294901760
    %v739 = vsub.f32 %v40, %v738
    %v740 = vand.u32 %v739, 4294901760
    %741 = vmatmul.mubr.f32.gmra.mxu0 %v740
    %v742 = vpop.f32.mrf.mxu0
    %v743 = vadd.f32 %v629, %v742
    %v744 = vpop.f32.mrf.mxu0
    %v745 = vadd.f32 %v631, %v744
    %746 = vmatprep.mubr.f32.mxu0 0.0
    %v747 = vand.u32 %v41, 4294901760
    %v748 = vsub.f32 %v41, %v747
    %v749 = vand.u32 %v748, 4294901760
    %750 = vmatmul.mubr.f32.gmra.mxu0 %v749
    %v751 = vpop.f32.mrf.mxu0
    %v752 = vadd.f32 %v637, %v751
    %v753 = vpop.f32.mrf.mxu0
    %v754 = vadd.f32 %v639, %v753
    %755 = vdwg.mxu0
    %v756 = vand.u32 %v133, 4294901760
    %v757 = vsub.f32 %v133, %v756
    %v758 = vand.u32 %v757, 4294901760
    %759 = vmatprep.subr.mxu0 %v758
    %v760 = vand.u32 %v132, 4294901760
    %v761 = vsub.f32 %v132, %v760
    %v762 = vand.u32 %v761, 4294901760
    %763 = vmatpush1.msra.mxu0 %v762
    %v764 = vand.u32 %v127, 4294901760
    %v765 = vsub.f32 %v127, %v764
    %v766 = vand.u32 %v765, 4294901760
    %767 = vmatprep.subr.mxu0 %v766
    %v768 = vand.u32 %v126, 4294901760
    %v769 = vsub.f32 %v126, %v768
    %v770 = vand.u32 %v769, 4294901760
    %771 = vmatpush1.msra.mxu0 %v770
    %v772 = vand.u32 %v121, 4294901760
    %v773 = vsub.f32 %v121, %v772
    %v774 = vand.u32 %v773, 4294901760
    %775 = vmatprep.subr.mxu0 %v774
    %v776 = vand.u32 %v120, 4294901760
    %v777 = vsub.f32 %v120, %v776
    %v778 = vand.u32 %v777, 4294901760
    %779 = vmatpush1.msra.mxu0 %v778
    %v780 = vand.u32 %v115, 4294901760
    %v781 = vsub.f32 %v115, %v780
    %v782 = vand.u32 %v781, 4294901760
    %783 = vmatprep.subr.mxu0 %v782
    %v784 = vand.u32 %v114, 4294901760
    %v785 = vsub.f32 %v114, %v784
    %v786 = vand.u32 %v785, 4294901760
    %787 = vmatpush1.msra.mxu0 %v786
    %v788 = vand.u32 %v109, 4294901760
    %v789 = vsub.f32 %v109, %v788
    %v790 = vand.u32 %v789, 4294901760
    %791 = vmatprep.subr.mxu0 %v790
    %v792 = vand.u32 %v108, 4294901760
    %v793 = vsub.f32 %v108, %v792
    %v794 = vand.u32 %v793, 4294901760
    %795 = vmatpush1.msra.mxu0 %v794
    %v796 = vand.u32 %v103, 4294901760
    %v797 = vsub.f32 %v103, %v796
    %v798 = vand.u32 %v797, 4294901760
    %799 = vmatprep.subr.mxu0 %v798
    %v800 = vand.u32 %v102, 4294901760
    %v801 = vsub.f32 %v102, %v800
    %v802 = vand.u32 %v801, 4294901760
    %803 = vmatpush1.msra.mxu0 %v802
    %v804 = vand.u32 %v97, 4294901760
    %v805 = vsub.f32 %v97, %v804
    %v806 = vand.u32 %v805, 4294901760
    %807 = vmatprep.subr.mxu0 %v806
    %v808 = vand.u32 %v96, 4294901760
    %v809 = vsub.f32 %v96, %v808
    %v810 = vand.u32 %v809, 4294901760
    %811 = vmatpush1.msra.mxu0 %v810
    %v812 = vand.u32 %v91, 4294901760
    %v813 = vsub.f32 %v91, %v812
    %v814 = vand.u32 %v813, 4294901760
    %815 = vmatprep.subr.mxu0 %v814
    %v816 = vand.u32 %v90, 4294901760
    %v817 = vsub.f32 %v90, %v816
    %v818 = vand.u32 %v817, 4294901760
    %819 = vmatpush1.msra.mxu0 %v818
    %v820 = vand.u32 %v85, 4294901760
    %v821 = vsub.f32 %v85, %v820
    %v822 = vand.u32 %v821, 4294901760
    %823 = vmatprep.subr.mxu0 %v822
    %v824 = vand.u32 %v84, 4294901760
    %v825 = vsub.f32 %v84, %v824
    %v826 = vand.u32 %v825, 4294901760
    %827 = vmatpush1.msra.mxu0 %v826
    %v828 = vand.u32 %v79, 4294901760
    %v829 = vsub.f32 %v79, %v828
    %v830 = vand.u32 %v829, 4294901760
    %831 = vmatprep.subr.mxu0 %v830
    %v832 = vand.u32 %v78, 4294901760
    %v833 = vsub.f32 %v78, %v832
    %v834 = vand.u32 %v833, 4294901760
    %835 = vmatpush1.msra.mxu0 %v834
    %v836 = vand.u32 %v73, 4294901760
    %v837 = vsub.f32 %v73, %v836
    %v838 = vand.u32 %v837, 4294901760
    %839 = vmatprep.subr.mxu0 %v838
    %v840 = vand.u32 %v72, 4294901760
    %v841 = vsub.f32 %v72, %v840
    %v842 = vand.u32 %v841, 4294901760
    %843 = vmatpush1.msra.mxu0 %v842
    %v844 = vand.u32 %v67, 4294901760
    %v845 = vsub.f32 %v67, %v844
    %v846 = vand.u32 %v845, 4294901760
    %847 = vmatprep.subr.mxu0 %v846
    %v848 = vand.u32 %v66, 4294901760
    %v849 = vsub.f32 %v66, %v848
    %v850 = vand.u32 %v849, 4294901760
    %851 = vmatpush1.msra.mxu0 %v850
    %v852 = vand.u32 %v61, 4294901760
    %v853 = vsub.f32 %v61, %v852
    %v854 = vand.u32 %v853, 4294901760
    %855 = vmatprep.subr.mxu0 %v854
    %v856 = vand.u32 %v60, 4294901760
    %v857 = vsub.f32 %v60, %v856
    %v858 = vand.u32 %v857, 4294901760
    %859 = vmatpush1.msra.mxu0 %v858
    %v860 = vand.u32 %v55, 4294901760
    %v861 = vsub.f32 %v55, %v860
    %v862 = vand.u32 %v861, 4294901760
    %863 = vmatprep.subr.mxu0 %v862
    %v864 = vand.u32 %v54, 4294901760
    %v865 = vsub.f32 %v54, %v864
    %v866 = vand.u32 %v865, 4294901760
    %867 = vmatpush1.msra.mxu0 %v866
    %v868 = vand.u32 %v49, 4294901760
    %v869 = vsub.f32 %v49, %v868
    %v870 = vand.u32 %v869, 4294901760
    %871 = vmatprep.subr.mxu0 %v870
    %v872 = vand.u32 %v48, 4294901760
    %v873 = vsub.f32 %v48, %v872
    %v874 = vand.u32 %v873, 4294901760
    %875 = vmatpush1.msra.mxu0 %v874
    %v876 = vand.u32 %v43, 4294901760
    %v877 = vsub.f32 %v43, %v876
    %v878 = vand.u32 %v877, 4294901760
    %879 = vmatprep.subr.mxu0 %v878
    %v880 = vand.u32 %v42, 4294901760
    %v881 = vsub.f32 %v42, %v880
    %v882 = vand.u32 %v881, 4294901760
    %883 = vmatpush1.msra.mxu0 %v882
    %884 = vmatprep.subr.mxu0 0.0
    %885 = vmatpush2.msra.mxu0 0.0
    %886 = vmatprep.subr.mxu0 0.0
    %887 = vmatpush2.msra.mxu0 0.0
    %888 = vmatprep.subr.mxu0 0.0
    %889 = vmatpush2.msra.mxu0 0.0
    %890 = vmatprep.subr.mxu0 0.0
    %891 = vmatpush2.msra.mxu0 0.0
    %892 = vmatprep.subr.mxu0 0.0
    %893 = vmatpush2.msra.mxu0 0.0
    %894 = vmatprep.subr.mxu0 0.0
    %895 = vmatpush2.msra.mxu0 0.0
    %896 = vmatprep.subr.mxu0 0.0
    %897 = vmatpush2.msra.mxu0 0.0
    %898 = vmatprep.subr.mxu0 0.0
    %899 = vmatpush2.msra.mxu0 0.0
    %900 = vmatprep.subr.mxu0 0.0
    %901 = vmatpush2.msra.mxu0 0.0
    %902 = vmatprep.subr.mxu0 0.0
    %903 = vmatpush2.msra.mxu0 0.0
    %904 = vmatprep.subr.mxu0 0.0
    %905 = vmatpush2.msra.mxu0 0.0
    %906 = vmatprep.subr.mxu0 0.0
    %907 = vmatpush2.msra.mxu0 0.0
    %908 = vmatprep.subr.mxu0 0.0
    %909 = vmatpush2.msra.mxu0 0.0
    %910 = vmatprep.subr.mxu0 0.0
    %911 = vmatpush2.msra.mxu0 0.0
    %912 = vmatprep.subr.mxu0 0.0
    %913 = vmatpush2.msra.mxu0 0.0
    %914 = vmatprep.subr.mxu0 0.0
    %915 = vmatpush2.msra.mxu0 0.0
    %916 = vmatprep.mubr.f32.mxu0 0.0
    %v917 = vand.u32 %v40, 4294901760
    %918 = vmatmul.mubr.f32.gmra.mxu0 %v917
    %v919 = vpop.f32.mrf.mxu0
    %v920 = vadd.f32 %v743, %v919
    %v921 = vpop.f32.mrf.mxu0
    %v922 = vadd.f32 %v745, %v921
    %923 = vmatprep.mubr.f32.mxu0 0.0
    %v924 = vand.u32 %v41, 4294901760
    %925 = vmatmul.mubr.f32.gmra.mxu0 %v924
    %v926 = vpop.f32.mrf.mxu0
    %v927 = vadd.f32 %v752, %v926
    %v928 = vpop.f32.mrf.mxu0
    %v929 = vadd.f32 %v754, %v928
    %930 = vdwg.mxu0
    %v931 = vand.u32 %v133, 4294901760
    %932 = vmatprep.subr.mxu0 %v931
    %v933 = vand.u32 %v132, 4294901760
    %934 = vmatpush1.msra.mxu0 %v933
    %v935 = vand.u32 %v127, 4294901760
    %936 = vmatprep.subr.mxu0 %v935
    %v937 = vand.u32 %v126, 4294901760
    %938 = vmatpush1.msra.mxu0 %v937
    %v939 = vand.u32 %v121, 4294901760
    %940 = vmatprep.subr.mxu0 %v939
    %v941 = vand.u32 %v120, 4294901760
    %942 = vmatpush1.msra.mxu0 %v941
    %v943 = vand.u32 %v115, 4294901760
    %944 = vmatprep.subr.mxu0 %v943
    %v945 = vand.u32 %v114, 4294901760
    %946 = vmatpush1.msra.mxu0 %v945
    %v947 = vand.u32 %v109, 4294901760
    %948 = vmatprep.subr.mxu0 %v947
    %v949 = vand.u32 %v108, 4294901760
    %950 = vmatpush1.msra.mxu0 %v949
    %v951 = vand.u32 %v103, 4294901760
    %952 = vmatprep.subr.mxu0 %v951
    %v953 = vand.u32 %v102, 4294901760
    %954 = vmatpush1.msra.mxu0 %v953
    %v955 = vand.u32 %v97, 4294901760
    %956 = vmatprep.subr.mxu0 %v955
    %v957 = vand.u32 %v96, 4294901760
    %958 = vmatpush1.msra.mxu0 %v957
    %v959 = vand.u32 %v91, 4294901760
    %960 = vmatprep.subr.mxu0 %v959
    %v961 = vand.u32 %v90, 4294901760
    %962 = vmatpush1.msra.mxu0 %v961
    %v963 = vand.u32 %v85, 4294901760
    %964 = vmatprep.subr.mxu0 %v963
    %v965 = vand.u32 %v84, 4294901760
    %966 = vmatpush1.msra.mxu0 %v965
    %v967 = vand.u32 %v79, 4294901760
    %968 = vmatprep.subr.mxu0 %v967
    %v969 = vand.u32 %v78, 4294901760
    %970 = vmatpush1.msra.mxu0 %v969
    %v971 = vand.u32 %v73, 4294901760
    %972 = vmatprep.subr.mxu0 %v971
    %v973 = vand.u32 %v72, 4294901760
    %974 = vmatpush1.msra.mxu0 %v973
    %v975 = vand.u32 %v67, 4294901760
    %976 = vmatprep.subr.mxu0 %v975
    %v977 = vand.u32 %v66, 4294901760
    %978 = vmatpush1.msra.mxu0 %v977
    %v979 = vand.u32 %v61, 4294901760
    %980 = vmatprep.subr.mxu0 %v979
    %v981 = vand.u32 %v60, 4294901760
    %982 = vmatpush1.msra.mxu0 %v981
    %v983 = vand.u32 %v55, 4294901760
    %984 = vmatprep.subr.mxu0 %v983
    %v985 = vand.u32 %v54, 4294901760
    %986 = vmatpush1.msra.mxu0 %v985
    %v987 = vand.u32 %v49, 4294901760
    %988 = vmatprep.subr.mxu0 %v987
    %v989 = vand.u32 %v48, 4294901760
    %990 = vmatpush1.msra.mxu0 %v989
    %v991 = vand.u32 %v43, 4294901760
    %992 = vmatprep.subr.mxu0 %v991
    %v993 = vand.u32 %v42, 4294901760
    %994 = vmatpush1.msra.mxu0 %v993
    %995 = vmatprep.subr.mxu0 0.0
    %996 = vmatpush2.msra.mxu0 0.0
    %997 = vmatprep.subr.mxu0 0.0
    %998 = vmatpush2.msra.mxu0 0.0
    %999 = vmatprep.subr.mxu0 0.0
    %1000 = vmatpush2.msra.mxu0 0.0
    %1001 = vmatprep.subr.mxu0 0.0
    %1002 = vmatpush2.msra.mxu0 0.0
    %1003 = vmatprep.subr.mxu0 0.0
    %1004 = vmatpush2.msra.mxu0 0.0
    %1005 = vmatprep.subr.mxu0 0.0
    %1006 = vmatpush2.msra.mxu0 0.0
    %1007 = vmatprep.subr.mxu0 0.0
    %1008 = vmatpush2.msra.mxu0 0.0
    %1009 = vmatprep.subr.mxu0 0.0
    %1010 = vmatpush2.msra.mxu0 0.0
    %1011 = vmatprep.subr.mxu0 0.0
    %1012 = vmatpush2.msra.mxu0 0.0
    %1013 = vmatprep.subr.mxu0 0.0
    %1014 = vmatpush2.msra.mxu0 0.0
    %1015 = vmatprep.subr.mxu0 0.0
    %1016 = vmatpush2.msra.mxu0 0.0
    %1017 = vmatprep.subr.mxu0 0.0
    %1018 = vmatpush2.msra.mxu0 0.0
    %1019 = vmatprep.subr.mxu0 0.0
    %1020 = vmatpush2.msra.mxu0 0.0
    %1021 = vmatprep.subr.mxu0 0.0
    %1022 = vmatpush2.msra.mxu0 0.0
    %1023 = vmatprep.subr.mxu0 0.0
    %1024 = vmatpush2.msra.mxu0 0.0
    %1025 = vmatprep.subr.mxu0 0.0
    %1026 = vmatpush2.msra.mxu0 0.0
    %1027 = vmatprep.mubr.f32.mxu0 0.0
    %v1028 = vand.u32 %v40, 4294901760
    %1029 = vmatmul.mubr.f32.gmra.mxu0 %v1028
    %v1030 = vpop.f32.mrf.mxu0
    %v1031 = vadd.f32 %v920, %v1030
    %v1032 = vpop.f32.mrf.mxu0
    %v1033 = vadd.f32 %v922, %v1032
    %1034 = vmatprep.mubr.f32.mxu0 0.0
    %v1035 = vand.u32 %v41, 4294901760
    %1036 = vmatmul.mubr.f32.gmra.mxu0 %v1035
    %v1037 = vpop.f32.mrf.mxu0
    %v1038 = vadd.f32 %v927, %v1037
    %v1039 = vpop.f32.mrf.mxu0
    %v1040 = vadd.f32 %v929, %v1039
    %1041 = vdwg.mxu0
    %v1042 = vand.u32 %v135, 4294901760
    %1043 = vmatprep.subr.mxu0 %v1042
    %v1044 = vand.u32 %v134, 4294901760
    %1045 = vmatpush1.msra.mxu0 %v1044
    %v1046 = vand.u32 %v129, 4294901760
    %1047 = vmatprep.subr.mxu0 %v1046
    %v1048 = vand.u32 %v128, 4294901760
    %1049 = vmatpush1.msra.mxu0 %v1048
    %v1050 = vand.u32 %v123, 4294901760
    %1051 = vmatprep.subr.mxu0 %v1050
    %v1052 = vand.u32 %v122, 4294901760
    %1053 = vmatpush1.msra.mxu0 %v1052
    %v1054 = vand.u32 %v117, 4294901760
    %1055 = vmatprep.subr.mxu0 %v1054
    %v1056 = vand.u32 %v116, 4294901760
    %1057 = vmatpush1.msra.mxu0 %v1056
    %v1058 = vand.u32 %v111, 4294901760
    %1059 = vmatprep.subr.mxu0 %v1058
    %v1060 = vand.u32 %v110, 4294901760
    %1061 = vmatpush1.msra.mxu0 %v1060
    %v1062 = vand.u32 %v105, 4294901760
    %1063 = vmatprep.subr.mxu0 %v1062
    %v1064 = vand.u32 %v104, 4294901760
    %1065 = vmatpush1.msra.mxu0 %v1064
    %v1066 = vand.u32 %v99, 4294901760
    %1067 = vmatprep.subr.mxu0 %v1066
    %v1068 = vand.u32 %v98, 4294901760
    %1069 = vmatpush1.msra.mxu0 %v1068
    %v1070 = vand.u32 %v93, 4294901760
    %1071 = vmatprep.subr.mxu0 %v1070
    %v1072 = vand.u32 %v92, 4294901760
    %1073 = vmatpush1.msra.mxu0 %v1072
    %v1074 = vand.u32 %v87, 4294901760
    %1075 = vmatprep.subr.mxu0 %v1074
    %v1076 = vand.u32 %v86, 4294901760
    %1077 = vmatpush1.msra.mxu0 %v1076
    %v1078 = vand.u32 %v81, 4294901760
    %1079 = vmatprep.subr.mxu0 %v1078
    %v1080 = vand.u32 %v80, 4294901760
    %1081 = vmatpush1.msra.mxu0 %v1080
    %v1082 = vand.u32 %v75, 4294901760
    %1083 = vmatprep.subr.mxu0 %v1082
    %v1084 = vand.u32 %v74, 4294901760
    %1085 = vmatpush1.msra.mxu0 %v1084
    %v1086 = vand.u32 %v69, 4294901760
    %1087 = vmatprep.subr.mxu0 %v1086
    %v1088 = vand.u32 %v68, 4294901760
    %1089 = vmatpush1.msra.mxu0 %v1088
    %v1090 = vand.u32 %v63, 4294901760
    %1091 = vmatprep.subr.mxu0 %v1090
    %v1092 = vand.u32 %v62, 4294901760
    %1093 = vmatpush1.msra.mxu0 %v1092
    %v1094 = vand.u32 %v57, 4294901760
    %1095 = vmatprep.subr.mxu0 %v1094
    %v1096 = vand.u32 %v56, 4294901760
    %1097 = vmatpush1.msra.mxu0 %v1096
    %v1098 = vand.u32 %v51, 4294901760
    %1099 = vmatprep.subr.mxu0 %v1098
    %v1100 = vand.u32 %v50, 4294901760
    %1101 = vmatpush1.msra.mxu0 %v1100
    %v1102 = vand.u32 %v45, 4294901760
    %1103 = vmatprep.subr.mxu0 %v1102
    %v1104 = vand.u32 %v44, 4294901760
    %1105 = vmatpush1.msra.mxu0 %v1104
    %1106 = vmatprep.subr.mxu0 0.0
    %1107 = vmatpush2.msra.mxu0 0.0
    %1108 = vmatprep.subr.mxu0 0.0
    %1109 = vmatpush2.msra.mxu0 0.0
    %1110 = vmatprep.subr.mxu0 0.0
    %1111 = vmatpush2.msra.mxu0 0.0
    %1112 = vmatprep.subr.mxu0 0.0
    %1113 = vmatpush2.msra.mxu0 0.0
    %1114 = vmatprep.subr.mxu0 0.0
    %1115 = vmatpush2.msra.mxu0 0.0
    %1116 = vmatprep.subr.mxu0 0.0
    %1117 = vmatpush2.msra.mxu0 0.0
    %1118 = vmatprep.subr.mxu0 0.0
    %1119 = vmatpush2.msra.mxu0 0.0
    %1120 = vmatprep.subr.mxu0 0.0
    %1121 = vmatpush2.msra.mxu0 0.0
    %1122 = vmatprep.subr.mxu0 0.0
    %1123 = vmatpush2.msra.mxu0 0.0
    %1124 = vmatprep.subr.mxu0 0.0
    %1125 = vmatpush2.msra.mxu0 0.0
    %1126 = vmatprep.subr.mxu0 0.0
    %1127 = vmatpush2.msra.mxu0 0.0
    %1128 = vmatprep.subr.mxu0 0.0
    %1129 = vmatpush2.msra.mxu0 0.0
    %1130 = vmatprep.subr.mxu0 0.0
    %1131 = vmatpush2.msra.mxu0 0.0
    %1132 = vmatprep.subr.mxu0 0.0
    %1133 = vmatpush2.msra.mxu0 0.0
    %1134 = vmatprep.subr.mxu0 0.0
    %1135 = vmatpush2.msra.mxu0 0.0
    %1136 = vmatprep.subr.mxu0 0.0
    %1137 = vmatpush2.msra.mxu0 0.0
    %1138 = vmatprep.mubr.f32.mxu0 0.0
    %v1139 = vand.u32 %v40, 4294901760
    %v1140 = vsub.f32 %v40, %v1139
    %v1141 = vand.u32 %v1140, 4294901760
    %v1142 = vsub.f32 %v1140, %v1141
    %v1143 = vand.u32 %v1142, 4294901760
    %1144 = vmatmul.mubr.f32.gmra.mxu0 %v1143
    %v1145 = vpop.f32.mrf.mxu0
    %v1146 = vadd.f32 0.0, %v1145
    %v1147 = vpop.f32.mrf.mxu0
    %v1148 = vadd.f32 0.0, %v1147
    %1149 = vmatprep.mubr.f32.mxu0 0.0
    %v1150 = vand.u32 %v41, 4294901760
    %v1151 = vsub.f32 %v41, %v1150
    %v1152 = vand.u32 %v1151, 4294901760
    %v1153 = vsub.f32 %v1151, %v1152
    %v1154 = vand.u32 %v1153, 4294901760
    %1155 = vmatmul.mubr.f32.gmra.mxu0 %v1154
    %v1156 = vpop.f32.mrf.mxu0
    %v1157 = vadd.f32 0.0, %v1156
    %v1158 = vpop.f32.mrf.mxu0
    %v1159 = vadd.f32 0.0, %v1158
    %1160 = vdwg.mxu0
    %v1161 = vand.u32 %v135, 4294901760
    %v1162 = vsub.f32 %v135, %v1161
    %v1163 = vand.u32 %v1162, 4294901760
    %v1164 = vsub.f32 %v1162, %v1163
    %v1165 = vand.u32 %v1164, 4294901760
    %1166 = vmatprep.subr.mxu0 %v1165
    %v1167 = vand.u32 %v134, 4294901760
    %v1168 = vsub.f32 %v134, %v1167
    %v1169 = vand.u32 %v1168, 4294901760
    %v1170 = vsub.f32 %v1168, %v1169
    %v1171 = vand.u32 %v1170, 4294901760
    %1172 = vmatpush1.msra.mxu0 %v1171
    %v1173 = vand.u32 %v129, 4294901760
    %v1174 = vsub.f32 %v129, %v1173
    %v1175 = vand.u32 %v1174, 4294901760
    %v1176 = vsub.f32 %v1174, %v1175
    %v1177 = vand.u32 %v1176, 4294901760
    %1178 = vmatprep.subr.mxu0 %v1177
    %v1179 = vand.u32 %v128, 4294901760
    %v1180 = vsub.f32 %v128, %v1179
    %v1181 = vand.u32 %v1180, 4294901760
    %v1182 = vsub.f32 %v1180, %v1181
    %v1183 = vand.u32 %v1182, 4294901760
    %1184 = vmatpush1.msra.mxu0 %v1183
    %v1185 = vand.u32 %v123, 4294901760
    %v1186 = vsub.f32 %v123, %v1185
    %v1187 = vand.u32 %v1186, 4294901760
    %v1188 = vsub.f32 %v1186, %v1187
    %v1189 = vand.u32 %v1188, 4294901760
    %1190 = vmatprep.subr.mxu0 %v1189
    %v1191 = vand.u32 %v122, 4294901760
    %v1192 = vsub.f32 %v122, %v1191
    %v1193 = vand.u32 %v1192, 4294901760
    %v1194 = vsub.f32 %v1192, %v1193
    %v1195 = vand.u32 %v1194, 4294901760
    %1196 = vmatpush1.msra.mxu0 %v1195
    %v1197 = vand.u32 %v117, 4294901760
    %v1198 = vsub.f32 %v117, %v1197
    %v1199 = vand.u32 %v1198, 4294901760
    %v1200 = vsub.f32 %v1198, %v1199
    %v1201 = vand.u32 %v1200, 4294901760
    %1202 = vmatprep.subr.mxu0 %v1201
    %v1203 = vand.u32 %v116, 4294901760
    %v1204 = vsub.f32 %v116, %v1203
    %v1205 = vand.u32 %v1204, 4294901760
    %v1206 = vsub.f32 %v1204, %v1205
    %v1207 = vand.u32 %v1206, 4294901760
    %1208 = vmatpush1.msra.mxu0 %v1207
    %v1209 = vand.u32 %v111, 4294901760
    %v1210 = vsub.f32 %v111, %v1209
    %v1211 = vand.u32 %v1210, 4294901760
    %v1212 = vsub.f32 %v1210, %v1211
    %v1213 = vand.u32 %v1212, 4294901760
    %1214 = vmatprep.subr.mxu0 %v1213
    %v1215 = vand.u32 %v110, 4294901760
    %v1216 = vsub.f32 %v110, %v1215
    %v1217 = vand.u32 %v1216, 4294901760
    %v1218 = vsub.f32 %v1216, %v1217
    %v1219 = vand.u32 %v1218, 4294901760
    %1220 = vmatpush1.msra.mxu0 %v1219
    %v1221 = vand.u32 %v105, 4294901760
    %v1222 = vsub.f32 %v105, %v1221
    %v1223 = vand.u32 %v1222, 4294901760
    %v1224 = vsub.f32 %v1222, %v1223
    %v1225 = vand.u32 %v1224, 4294901760
    %1226 = vmatprep.subr.mxu0 %v1225
    %v1227 = vand.u32 %v104, 4294901760
    %v1228 = vsub.f32 %v104, %v1227
    %v1229 = vand.u32 %v1228, 4294901760
    %v1230 = vsub.f32 %v1228, %v1229
    %v1231 = vand.u32 %v1230, 4294901760
    %1232 = vmatpush1.msra.mxu0 %v1231
    %v1233 = vand.u32 %v99, 4294901760
    %v1234 = vsub.f32 %v99, %v1233
    %v1235 = vand.u32 %v1234, 4294901760
    %v1236 = vsub.f32 %v1234, %v1235
    %v1237 = vand.u32 %v1236, 4294901760
    %1238 = vmatprep.subr.mxu0 %v1237
    %v1239 = vand.u32 %v98, 4294901760
    %v1240 = vsub.f32 %v98, %v1239
    %v1241 = vand.u32 %v1240, 4294901760
    %v1242 = vsub.f32 %v1240, %v1241
    %v1243 = vand.u32 %v1242, 4294901760
    %1244 = vmatpush1.msra.mxu0 %v1243
    %v1245 = vand.u32 %v93, 4294901760
    %v1246 = vsub.f32 %v93, %v1245
    %v1247 = vand.u32 %v1246, 4294901760
    %v1248 = vsub.f32 %v1246, %v1247
    %v1249 = vand.u32 %v1248, 4294901760
    %1250 = vmatprep.subr.mxu0 %v1249
    %v1251 = vand.u32 %v92, 4294901760
    %v1252 = vsub.f32 %v92, %v1251
    %v1253 = vand.u32 %v1252, 4294901760
    %v1254 = vsub.f32 %v1252, %v1253
    %v1255 = vand.u32 %v1254, 4294901760
    %1256 = vmatpush1.msra.mxu0 %v1255
    %v1257 = vand.u32 %v87, 4294901760
    %v1258 = vsub.f32 %v87, %v1257
    %v1259 = vand.u32 %v1258, 4294901760
    %v1260 = vsub.f32 %v1258, %v1259
    %v1261 = vand.u32 %v1260, 4294901760
    %1262 = vmatprep.subr.mxu0 %v1261
    %v1263 = vand.u32 %v86, 4294901760
    %v1264 = vsub.f32 %v86, %v1263
    %v1265 = vand.u32 %v1264, 4294901760
    %v1266 = vsub.f32 %v1264, %v1265
    %v1267 = vand.u32 %v1266, 4294901760
    %1268 = vmatpush1.msra.mxu0 %v1267
    %v1269 = vand.u32 %v81, 4294901760
    %v1270 = vsub.f32 %v81, %v1269
    %v1271 = vand.u32 %v1270, 4294901760
    %v1272 = vsub.f32 %v1270, %v1271
    %v1273 = vand.u32 %v1272, 4294901760
    %1274 = vmatprep.subr.mxu0 %v1273
    %v1275 = vand.u32 %v80, 4294901760
    %v1276 = vsub.f32 %v80, %v1275
    %v1277 = vand.u32 %v1276, 4294901760
    %v1278 = vsub.f32 %v1276, %v1277
    %v1279 = vand.u32 %v1278, 4294901760
    %1280 = vmatpush1.msra.mxu0 %v1279
    %v1281 = vand.u32 %v75, 4294901760
    %v1282 = vsub.f32 %v75, %v1281
    %v1283 = vand.u32 %v1282, 4294901760
    %v1284 = vsub.f32 %v1282, %v1283
    %v1285 = vand.u32 %v1284, 4294901760
    %1286 = vmatprep.subr.mxu0 %v1285
    %v1287 = vand.u32 %v74, 4294901760
    %v1288 = vsub.f32 %v74, %v1287
    %v1289 = vand.u32 %v1288, 4294901760
    %v1290 = vsub.f32 %v1288, %v1289
    %v1291 = vand.u32 %v1290, 4294901760
    %1292 = vmatpush1.msra.mxu0 %v1291
    %v1293 = vand.u32 %v69, 4294901760
    %v1294 = vsub.f32 %v69, %v1293
    %v1295 = vand.u32 %v1294, 4294901760
    %v1296 = vsub.f32 %v1294, %v1295
    %v1297 = vand.u32 %v1296, 4294901760
    %1298 = vmatprep.subr.mxu0 %v1297
    %v1299 = vand.u32 %v68, 4294901760
    %v1300 = vsub.f32 %v68, %v1299
    %v1301 = vand.u32 %v1300, 4294901760
    %v1302 = vsub.f32 %v1300, %v1301
    %v1303 = vand.u32 %v1302, 4294901760
    %1304 = vmatpush1.msra.mxu0 %v1303
    %v1305 = vand.u32 %v63, 4294901760
    %v1306 = vsub.f32 %v63, %v1305
    %v1307 = vand.u32 %v1306, 4294901760
    %v1308 = vsub.f32 %v1306, %v1307
    %v1309 = vand.u32 %v1308, 4294901760
    %1310 = vmatprep.subr.mxu0 %v1309
    %v1311 = vand.u32 %v62, 4294901760
    %v1312 = vsub.f32 %v62, %v1311
    %v1313 = vand.u32 %v1312, 4294901760
    %v1314 = vsub.f32 %v1312, %v1313
    %v1315 = vand.u32 %v1314, 4294901760
    %1316 = vmatpush1.msra.mxu0 %v1315
    %v1317 = vand.u32 %v57, 4294901760
    %v1318 = vsub.f32 %v57, %v1317
    %v1319 = vand.u32 %v1318, 4294901760
    %v1320 = vsub.f32 %v1318, %v1319
    %v1321 = vand.u32 %v1320, 4294901760
    %1322 = vmatprep.subr.mxu0 %v1321
    %v1323 = vand.u32 %v56, 4294901760
    %v1324 = vsub.f32 %v56, %v1323
    %v1325 = vand.u32 %v1324, 4294901760
    %v1326 = vsub.f32 %v1324, %v1325
    %v1327 = vand.u32 %v1326, 4294901760
    %1328 = vmatpush1.msra.mxu0 %v1327
    %v1329 = vand.u32 %v51, 4294901760
    %v1330 = vsub.f32 %v51, %v1329
    %v1331 = vand.u32 %v1330, 4294901760
    %v1332 = vsub.f32 %v1330, %v1331
    %v1333 = vand.u32 %v1332, 4294901760
    %1334 = vmatprep.subr.mxu0 %v1333
    %v1335 = vand.u32 %v50, 4294901760
    %v1336 = vsub.f32 %v50, %v1335
    %v1337 = vand.u32 %v1336, 4294901760
    %v1338 = vsub.f32 %v1336, %v1337
    %v1339 = vand.u32 %v1338, 4294901760
    %1340 = vmatpush1.msra.mxu0 %v1339
    %v1341 = vand.u32 %v45, 4294901760
    %v1342 = vsub.f32 %v45, %v1341
    %v1343 = vand.u32 %v1342, 4294901760
    %v1344 = vsub.f32 %v1342, %v1343
    %v1345 = vand.u32 %v1344, 4294901760
    %1346 = vmatprep.subr.mxu0 %v1345
    %v1347 = vand.u32 %v44, 4294901760
    %v1348 = vsub.f32 %v44, %v1347
    %v1349 = vand.u32 %v1348, 4294901760
    %v1350 = vsub.f32 %v1348, %v1349
    %v1351 = vand.u32 %v1350, 4294901760
    %1352 = vmatpush1.msra.mxu0 %v1351
    %1353 = vmatprep.subr.mxu0 0.0
    %1354 = vmatpush2.msra.mxu0 0.0
    %1355 = vmatprep.subr.mxu0 0.0
    %1356 = vmatpush2.msra.mxu0 0.0
    %1357 = vmatprep.subr.mxu0 0.0
    %1358 = vmatpush2.msra.mxu0 0.0
    %1359 = vmatprep.subr.mxu0 0.0
    %1360 = vmatpush2.msra.mxu0 0.0
    %1361 = vmatprep.subr.mxu0 0.0
    %1362 = vmatpush2.msra.mxu0 0.0
    %1363 = vmatprep.subr.mxu0 0.0
    %1364 = vmatpush2.msra.mxu0 0.0
    %1365 = vmatprep.subr.mxu0 0.0
    %1366 = vmatpush2.msra.mxu0 0.0
    %1367 = vmatprep.subr.mxu0 0.0
    %1368 = vmatpush2.msra.mxu0 0.0
    %1369 = vmatprep.subr.mxu0 0.0
    %1370 = vmatpush2.msra.mxu0 0.0
    %1371 = vmatprep.subr.mxu0 0.0
    %1372 = vmatpush2.msra.mxu0 0.0
    %1373 = vmatprep.subr.mxu0 0.0
    %1374 = vmatpush2.msra.mxu0 0.0
    %1375 = vmatprep.subr.mxu0 0.0
    %1376 = vmatpush2.msra.mxu0 0.0
    %1377 = vmatprep.subr.mxu0 0.0
    %1378 = vmatpush2.msra.mxu0 0.0
    %1379 = vmatprep.subr.mxu0 0.0
    %1380 = vmatpush2.msra.mxu0 0.0
    %1381 = vmatprep.subr.mxu0 0.0
    %1382 = vmatpush2.msra.mxu0 0.0
    %1383 = vmatprep.subr.mxu0 0.0
    %1384 = vmatpush2.msra.mxu0 0.0
    %1385 = vmatprep.mubr.f32.mxu0 0.0
    %v1386 = vand.u32 %v40, 4294901760
    %1387 = vmatmul.mubr.f32.gmra.mxu0 %v1386
    %v1388 = vpop.f32.mrf.mxu0
    %v1389 = vadd.f32 %v1146, %v1388
    %v1390 = vpop.f32.mrf.mxu0
    %v1391 = vadd.f32 %v1148, %v1390
    %1392 = vmatprep.mubr.f32.mxu0 0.0
    %v1393 = vand.u32 %v41, 4294901760
    %1394 = vmatmul.mubr.f32.gmra.mxu0 %v1393
    %v1395 = vpop.f32.mrf.mxu0
    %v1396 = vadd.f32 %v1157, %v1395
    %v1397 = vpop.f32.mrf.mxu0
    %v1398 = vadd.f32 %v1159, %v1397
    %1399 = vdwg.mxu0
    %v1400 = vand.u32 %v135, 4294901760
    %v1401 = vsub.f32 %v135, %v1400
    %1402 = vmatprep.subr.mxu0 %v1401
    %v1403 = vand.u32 %v134, 4294901760
    %v1404 = vsub.f32 %v134, %v1403
    %1405 = vmatpush1.msra.mxu0 %v1404
    %v1406 = vand.u32 %v129, 4294901760
    %v1407 = vsub.f32 %v129, %v1406
    %1408 = vmatprep.subr.mxu0 %v1407
    %v1409 = vand.u32 %v128, 4294901760
    %v1410 = vsub.f32 %v128, %v1409
    %1411 = vmatpush1.msra.mxu0 %v1410
    %v1412 = vand.u32 %v123, 4294901760
    %v1413 = vsub.f32 %v123, %v1412
    %1414 = vmatprep.subr.mxu0 %v1413
    %v1415 = vand.u32 %v122, 4294901760
    %v1416 = vsub.f32 %v122, %v1415
    %1417 = vmatpush1.msra.mxu0 %v1416
    %v1418 = vand.u32 %v117, 4294901760
    %v1419 = vsub.f32 %v117, %v1418
    %1420 = vmatprep.subr.mxu0 %v1419
    %v1421 = vand.u32 %v116, 4294901760
    %v1422 = vsub.f32 %v116, %v1421
    %1423 = vmatpush1.msra.mxu0 %v1422
    %v1424 = vand.u32 %v111, 4294901760
    %v1425 = vsub.f32 %v111, %v1424
    %1426 = vmatprep.subr.mxu0 %v1425
    %v1427 = vand.u32 %v110, 4294901760
    %v1428 = vsub.f32 %v110, %v1427
    %1429 = vmatpush1.msra.mxu0 %v1428
    %v1430 = vand.u32 %v105, 4294901760
    %v1431 = vsub.f32 %v105, %v1430
    %1432 = vmatprep.subr.mxu0 %v1431
    %v1433 = vand.u32 %v104, 4294901760
    %v1434 = vsub.f32 %v104, %v1433
    %1435 = vmatpush1.msra.mxu0 %v1434
    %v1436 = vand.u32 %v99, 4294901760
    %v1437 = vsub.f32 %v99, %v1436
    %1438 = vmatprep.subr.mxu0 %v1437
    %v1439 = vand.u32 %v98, 4294901760
    %v1440 = vsub.f32 %v98, %v1439
    %1441 = vmatpush1.msra.mxu0 %v1440
    %v1442 = vand.u32 %v93, 4294901760
    %v1443 = vsub.f32 %v93, %v1442
    %1444 = vmatprep.subr.mxu0 %v1443
    %v1445 = vand.u32 %v92, 4294901760
    %v1446 = vsub.f32 %v92, %v1445
    %1447 = vmatpush1.msra.mxu0 %v1446
    %v1448 = vand.u32 %v87, 4294901760
    %v1449 = vsub.f32 %v87, %v1448
    %1450 = vmatprep.subr.mxu0 %v1449
    %v1451 = vand.u32 %v86, 4294901760
    %v1452 = vsub.f32 %v86, %v1451
    %1453 = vmatpush1.msra.mxu0 %v1452
    %v1454 = vand.u32 %v81, 4294901760
    %v1455 = vsub.f32 %v81, %v1454
    %1456 = vmatprep.subr.mxu0 %v1455
    %v1457 = vand.u32 %v80, 4294901760
    %v1458 = vsub.f32 %v80, %v1457
    %1459 = vmatpush1.msra.mxu0 %v1458
    %v1460 = vand.u32 %v75, 4294901760
    %v1461 = vsub.f32 %v75, %v1460
    %1462 = vmatprep.subr.mxu0 %v1461
    %v1463 = vand.u32 %v74, 4294901760
    %v1464 = vsub.f32 %v74, %v1463
    %1465 = vmatpush1.msra.mxu0 %v1464
    %v1466 = vand.u32 %v69, 4294901760
    %v1467 = vsub.f32 %v69, %v1466
    %1468 = vmatprep.subr.mxu0 %v1467
    %v1469 = vand.u32 %v68, 4294901760
    %v1470 = vsub.f32 %v68, %v1469
    %1471 = vmatpush1.msra.mxu0 %v1470
    %v1472 = vand.u32 %v63, 4294901760
    %v1473 = vsub.f32 %v63, %v1472
    %1474 = vmatprep.subr.mxu0 %v1473
    %v1475 = vand.u32 %v62, 4294901760
    %v1476 = vsub.f32 %v62, %v1475
    %1477 = vmatpush1.msra.mxu0 %v1476
    %v1478 = vand.u32 %v57, 4294901760
    %v1479 = vsub.f32 %v57, %v1478
    %1480 = vmatprep.subr.mxu0 %v1479
    %v1481 = vand.u32 %v56, 4294901760
    %v1482 = vsub.f32 %v56, %v1481
    %1483 = vmatpush1.msra.mxu0 %v1482
    %v1484 = vand.u32 %v51, 4294901760
    %v1485 = vsub.f32 %v51, %v1484
    %1486 = vmatprep.subr.mxu0 %v1485
    %v1487 = vand.u32 %v50, 4294901760
    %v1488 = vsub.f32 %v50, %v1487
    %1489 = vmatpush1.msra.mxu0 %v1488
    %v1490 = vand.u32 %v45, 4294901760
    %v1491 = vsub.f32 %v45, %v1490
    %1492 = vmatprep.subr.mxu0 %v1491
    %v1493 = vand.u32 %v44, 4294901760
    %v1494 = vsub.f32 %v44, %v1493
    %1495 = vmatpush1.msra.mxu0 %v1494
    %1496 = vmatprep.subr.mxu0 0.0
    %1497 = vmatpush2.msra.mxu0 0.0
    %1498 = vmatprep.subr.mxu0 0.0
    %1499 = vmatpush2.msra.mxu0 0.0
    %1500 = vmatprep.subr.mxu0 0.0
    %1501 = vmatpush2.msra.mxu0 0.0
    %1502 = vmatprep.subr.mxu0 0.0
    %1503 = vmatpush2.msra.mxu0 0.0
    %1504 = vmatprep.subr.mxu0 0.0
    %1505 = vmatpush2.msra.mxu0 0.0
    %1506 = vmatprep.subr.mxu0 0.0
    %1507 = vmatpush2.msra.mxu0 0.0
    %1508 = vmatprep.subr.mxu0 0.0
    %1509 = vmatpush2.msra.mxu0 0.0
    %1510 = vmatprep.subr.mxu0 0.0
    %1511 = vmatpush2.msra.mxu0 0.0
    %1512 = vmatprep.subr.mxu0 0.0
    %1513 = vmatpush2.msra.mxu0 0.0
    %1514 = vmatprep.subr.mxu0 0.0
    %1515 = vmatpush2.msra.mxu0 0.0
    %1516 = vmatprep.subr.mxu0 0.0
    %1517 = vmatpush2.msra.mxu0 0.0
    %1518 = vmatprep.subr.mxu0 0.0
    %1519 = vmatpush2.msra.mxu0 0.0
    %1520 = vmatprep.subr.mxu0 0.0
    %1521 = vmatpush2.msra.mxu0 0.0
    %1522 = vmatprep.subr.mxu0 0.0
    %1523 = vmatpush2.msra.mxu0 0.0
    %1524 = vmatprep.subr.mxu0 0.0
    %1525 = vmatpush2.msra.mxu0 0.0
    %1526 = vmatprep.subr.mxu0 0.0
    %1527 = vmatpush2.msra.mxu0 0.0
    %1528 = vmatprep.mubr.f32.mxu0 0.0
    %v1529 = vand.u32 %v40, 4294901760
    %v1530 = vsub.f32 %v40, %v1529
    %1531 = vmatmul.mubr.f32.gmra.mxu0 %v1530
    %v1532 = vpop.f32.mrf.mxu0
    %v1533 = vadd.f32 %v1389, %v1532
    %v1534 = vpop.f32.mrf.mxu0
    %v1535 = vadd.f32 %v1391, %v1534
    %1536 = vmatprep.mubr.f32.mxu0 0.0
    %v1537 = vand.u32 %v41, 4294901760
    %v1538 = vsub.f32 %v41, %v1537
    %1539 = vmatmul.mubr.f32.gmra.mxu0 %v1538
    %v1540 = vpop.f32.mrf.mxu0
    %v1541 = vadd.f32 %v1396, %v1540
    %v1542 = vpop.f32.mrf.mxu0
    %v1543 = vadd.f32 %v1398, %v1542
    %1544 = vdwg.mxu0
    %v1545 = vand.u32 %v135, 4294901760
    %1546 = vmatprep.subr.mxu0 %v1545
    %v1547 = vand.u32 %v134, 4294901760
    %1548 = vmatpush1.msra.mxu0 %v1547
    %v1549 = vand.u32 %v129, 4294901760
    %1550 = vmatprep.subr.mxu0 %v1549
    %v1551 = vand.u32 %v128, 4294901760
    %1552 = vmatpush1.msra.mxu0 %v1551
    %v1553 = vand.u32 %v123, 4294901760
    %1554 = vmatprep.subr.mxu0 %v1553
    %v1555 = vand.u32 %v122, 4294901760
    %1556 = vmatpush1.msra.mxu0 %v1555
    %v1557 = vand.u32 %v117, 4294901760
    %1558 = vmatprep.subr.mxu0 %v1557
    %v1559 = vand.u32 %v116, 4294901760
    %1560 = vmatpush1.msra.mxu0 %v1559
    %v1561 = vand.u32 %v111, 4294901760
    %1562 = vmatprep.subr.mxu0 %v1561
    %v1563 = vand.u32 %v110, 4294901760
    %1564 = vmatpush1.msra.mxu0 %v1563
    %v1565 = vand.u32 %v105, 4294901760
    %1566 = vmatprep.subr.mxu0 %v1565
    %v1567 = vand.u32 %v104, 4294901760
    %1568 = vmatpush1.msra.mxu0 %v1567
    %v1569 = vand.u32 %v99, 4294901760
    %1570 = vmatprep.subr.mxu0 %v1569
    %v1571 = vand.u32 %v98, 4294901760
    %1572 = vmatpush1.msra.mxu0 %v1571
    %v1573 = vand.u32 %v93, 4294901760
    %1574 = vmatprep.subr.mxu0 %v1573
    %v1575 = vand.u32 %v92, 4294901760
    %1576 = vmatpush1.msra.mxu0 %v1575
    %v1577 = vand.u32 %v87, 4294901760
    %1578 = vmatprep.subr.mxu0 %v1577
    %v1579 = vand.u32 %v86, 4294901760
    %1580 = vmatpush1.msra.mxu0 %v1579
    %v1581 = vand.u32 %v81, 4294901760
    %1582 = vmatprep.subr.mxu0 %v1581
    %v1583 = vand.u32 %v80, 4294901760
    %1584 = vmatpush1.msra.mxu0 %v1583
    %v1585 = vand.u32 %v75, 4294901760
    %1586 = vmatprep.subr.mxu0 %v1585
    %v1587 = vand.u32 %v74, 4294901760
    %1588 = vmatpush1.msra.mxu0 %v1587
    %v1589 = vand.u32 %v69, 4294901760
    %1590 = vmatprep.subr.mxu0 %v1589
    %v1591 = vand.u32 %v68, 4294901760
    %1592 = vmatpush1.msra.mxu0 %v1591
    %v1593 = vand.u32 %v63, 4294901760
    %1594 = vmatprep.subr.mxu0 %v1593
    %v1595 = vand.u32 %v62, 4294901760
    %1596 = vmatpush1.msra.mxu0 %v1595
    %v1597 = vand.u32 %v57, 4294901760
    %1598 = vmatprep.subr.mxu0 %v1597
    %v1599 = vand.u32 %v56, 4294901760
    %1600 = vmatpush1.msra.mxu0 %v1599
    %v1601 = vand.u32 %v51, 4294901760
    %1602 = vmatprep.subr.mxu0 %v1601
    %v1603 = vand.u32 %v50, 4294901760
    %1604 = vmatpush1.msra.mxu0 %v1603
    %v1605 = vand.u32 %v45, 4294901760
    %1606 = vmatprep.subr.mxu0 %v1605
    %v1607 = vand.u32 %v44, 4294901760
    %1608 = vmatpush1.msra.mxu0 %v1607
    %1609 = vmatprep.subr.mxu0 0.0
    %1610 = vmatpush2.msra.mxu0 0.0
    %1611 = vmatprep.subr.mxu0 0.0
    %1612 = vmatpush2.msra.mxu0 0.0
    %1613 = vmatprep.subr.mxu0 0.0
    %1614 = vmatpush2.msra.mxu0 0.0
    %1615 = vmatprep.subr.mxu0 0.0
    %1616 = vmatpush2.msra.mxu0 0.0
    %1617 = vmatprep.subr.mxu0 0.0
    %1618 = vmatpush2.msra.mxu0 0.0
    %1619 = vmatprep.subr.mxu0 0.0
    %1620 = vmatpush2.msra.mxu0 0.0
    %1621 = vmatprep.subr.mxu0 0.0
    %1622 = vmatpush2.msra.mxu0 0.0
    %1623 = vmatprep.subr.mxu0 0.0
    %1624 = vmatpush2.msra.mxu0 0.0
    %1625 = vmatprep.subr.mxu0 0.0
    %1626 = vmatpush2.msra.mxu0 0.0
    %1627 = vmatprep.subr.mxu0 0.0
    %1628 = vmatpush2.msra.mxu0 0.0
    %1629 = vmatprep.subr.mxu0 0.0
    %1630 = vmatpush2.msra.mxu0 0.0
    %1631 = vmatprep.subr.mxu0 0.0
    %1632 = vmatpush2.msra.mxu0 0.0
    %1633 = vmatprep.subr.mxu0 0.0
    %1634 = vmatpush2.msra.mxu0 0.0
    %1635 = vmatprep.subr.mxu0 0.0
    %1636 = vmatpush2.msra.mxu0 0.0
    %1637 = vmatprep.subr.mxu0 0.0
    %1638 = vmatpush2.msra.mxu0 0.0
    %1639 = vmatprep.subr.mxu0 0.0
    %1640 = vmatpush2.msra.mxu0 0.0
    %1641 = vmatprep.mubr.f32.mxu0 0.0
    %v1642 = vand.u32 %v40, 4294901760
    %v1643 = vsub.f32 %v40, %v1642
    %v1644 = vand.u32 %v1643, 4294901760
    %1645 = vmatmul.mubr.f32.gmra.mxu0 %v1644
    %v1646 = vpop.f32.mrf.mxu0
    %v1647 = vadd.f32 %v1533, %v1646
    %v1648 = vpop.f32.mrf.mxu0
    %v1649 = vadd.f32 %v1535, %v1648
    %1650 = vmatprep.mubr.f32.mxu0 0.0
    %v1651 = vand.u32 %v41, 4294901760
    %v1652 = vsub.f32 %v41, %v1651
    %v1653 = vand.u32 %v1652, 4294901760
    %1654 = vmatmul.mubr.f32.gmra.mxu0 %v1653
    %v1655 = vpop.f32.mrf.mxu0
    %v1656 = vadd.f32 %v1541, %v1655
    %v1657 = vpop.f32.mrf.mxu0
    %v1658 = vadd.f32 %v1543, %v1657
    %1659 = vdwg.mxu0
    %v1660 = vand.u32 %v135, 4294901760
    %v1661 = vsub.f32 %v135, %v1660
    %v1662 = vand.u32 %v1661, 4294901760
    %1663 = vmatprep.subr.mxu0 %v1662
    %v1664 = vand.u32 %v134, 4294901760
    %v1665 = vsub.f32 %v134, %v1664
    %v1666 = vand.u32 %v1665, 4294901760
    %1667 = vmatpush1.msra.mxu0 %v1666
    %v1668 = vand.u32 %v129, 4294901760
    %v1669 = vsub.f32 %v129, %v1668
    %v1670 = vand.u32 %v1669, 4294901760
    %1671 = vmatprep.subr.mxu0 %v1670
    %v1672 = vand.u32 %v128, 4294901760
    %v1673 = vsub.f32 %v128, %v1672
    %v1674 = vand.u32 %v1673, 4294901760
    %1675 = vmatpush1.msra.mxu0 %v1674
    %v1676 = vand.u32 %v123, 4294901760
    %v1677 = vsub.f32 %v123, %v1676
    %v1678 = vand.u32 %v1677, 4294901760
    %1679 = vmatprep.subr.mxu0 %v1678
    %v1680 = vand.u32 %v122, 4294901760
    %v1681 = vsub.f32 %v122, %v1680
    %v1682 = vand.u32 %v1681, 4294901760
    %1683 = vmatpush1.msra.mxu0 %v1682
    %v1684 = vand.u32 %v117, 4294901760
    %v1685 = vsub.f32 %v117, %v1684
    %v1686 = vand.u32 %v1685, 4294901760
    %1687 = vmatprep.subr.mxu0 %v1686
    %v1688 = vand.u32 %v116, 4294901760
    %v1689 = vsub.f32 %v116, %v1688
    %v1690 = vand.u32 %v1689, 4294901760
    %1691 = vmatpush1.msra.mxu0 %v1690
    %v1692 = vand.u32 %v111, 4294901760
    %v1693 = vsub.f32 %v111, %v1692
    %v1694 = vand.u32 %v1693, 4294901760
    %1695 = vmatprep.subr.mxu0 %v1694
    %v1696 = vand.u32 %v110, 4294901760
    %v1697 = vsub.f32 %v110, %v1696
    %v1698 = vand.u32 %v1697, 4294901760
    %1699 = vmatpush1.msra.mxu0 %v1698
    %v1700 = vand.u32 %v105, 4294901760
    %v1701 = vsub.f32 %v105, %v1700
    %v1702 = vand.u32 %v1701, 4294901760
    %1703 = vmatprep.subr.mxu0 %v1702
    %v1704 = vand.u32 %v104, 4294901760
    %v1705 = vsub.f32 %v104, %v1704
    %v1706 = vand.u32 %v1705, 4294901760
    %1707 = vmatpush1.msra.mxu0 %v1706
    %v1708 = vand.u32 %v99, 4294901760
    %v1709 = vsub.f32 %v99, %v1708
    %v1710 = vand.u32 %v1709, 4294901760
    %1711 = vmatprep.subr.mxu0 %v1710
    %v1712 = vand.u32 %v98, 4294901760
    %v1713 = vsub.f32 %v98, %v1712
    %v1714 = vand.u32 %v1713, 4294901760
    %1715 = vmatpush1.msra.mxu0 %v1714
    %v1716 = vand.u32 %v93, 4294901760
    %v1717 = vsub.f32 %v93, %v1716
    %v1718 = vand.u32 %v1717, 4294901760
    %1719 = vmatprep.subr.mxu0 %v1718
    %v1720 = vand.u32 %v92, 4294901760
    %v1721 = vsub.f32 %v92, %v1720
    %v1722 = vand.u32 %v1721, 4294901760
    %1723 = vmatpush1.msra.mxu0 %v1722
    %v1724 = vand.u32 %v87, 4294901760
    %v1725 = vsub.f32 %v87, %v1724
    %v1726 = vand.u32 %v1725, 4294901760
    %1727 = vmatprep.subr.mxu0 %v1726
    %v1728 = vand.u32 %v86, 4294901760
    %v1729 = vsub.f32 %v86, %v1728
    %v1730 = vand.u32 %v1729, 4294901760
    %1731 = vmatpush1.msra.mxu0 %v1730
    %v1732 = vand.u32 %v81, 4294901760
    %v1733 = vsub.f32 %v81, %v1732
    %v1734 = vand.u32 %v1733, 4294901760
    %1735 = vmatprep.subr.mxu0 %v1734
    %v1736 = vand.u32 %v80, 4294901760
    %v1737 = vsub.f32 %v80, %v1736
    %v1738 = vand.u32 %v1737, 4294901760
    %1739 = vmatpush1.msra.mxu0 %v1738
    %v1740 = vand.u32 %v75, 4294901760
    %v1741 = vsub.f32 %v75, %v1740
    %v1742 = vand.u32 %v1741, 4294901760
    %1743 = vmatprep.subr.mxu0 %v1742
    %v1744 = vand.u32 %v74, 4294901760
    %v1745 = vsub.f32 %v74, %v1744
    %v1746 = vand.u32 %v1745, 4294901760
    %1747 = vmatpush1.msra.mxu0 %v1746
    %v1748 = vand.u32 %v69, 4294901760
    %v1749 = vsub.f32 %v69, %v1748
    %v1750 = vand.u32 %v1749, 4294901760
    %1751 = vmatprep.subr.mxu0 %v1750
    %v1752 = vand.u32 %v68, 4294901760
    %v1753 = vsub.f32 %v68, %v1752
    %v1754 = vand.u32 %v1753, 4294901760
    %1755 = vmatpush1.msra.mxu0 %v1754
    %v1756 = vand.u32 %v63, 4294901760
    %v1757 = vsub.f32 %v63, %v1756
    %v1758 = vand.u32 %v1757, 4294901760
    %1759 = vmatprep.subr.mxu0 %v1758
    %v1760 = vand.u32 %v62, 4294901760
    %v1761 = vsub.f32 %v62, %v1760
    %v1762 = vand.u32 %v1761, 4294901760
    %1763 = vmatpush1.msra.mxu0 %v1762
    %v1764 = vand.u32 %v57, 4294901760
    %v1765 = vsub.f32 %v57, %v1764
    %v1766 = vand.u32 %v1765, 4294901760
    %1767 = vmatprep.subr.mxu0 %v1766
    %v1768 = vand.u32 %v56, 4294901760
    %v1769 = vsub.f32 %v56, %v1768
    %v1770 = vand.u32 %v1769, 4294901760
    %1771 = vmatpush1.msra.mxu0 %v1770
    %v1772 = vand.u32 %v51, 4294901760
    %v1773 = vsub.f32 %v51, %v1772
    %v1774 = vand.u32 %v1773, 4294901760
    %1775 = vmatprep.subr.mxu0 %v1774
    %v1776 = vand.u32 %v50, 4294901760
    %v1777 = vsub.f32 %v50, %v1776
    %v1778 = vand.u32 %v1777, 4294901760
    %1779 = vmatpush1.msra.mxu0 %v1778
    %v1780 = vand.u32 %v45, 4294901760
    %v1781 = vsub.f32 %v45, %v1780
    %v1782 = vand.u32 %v1781, 4294901760
    %1783 = vmatprep.subr.mxu0 %v1782
    %v1784 = vand.u32 %v44, 4294901760
    %v1785 = vsub.f32 %v44, %v1784
    %v1786 = vand.u32 %v1785, 4294901760
    %1787 = vmatpush1.msra.mxu0 %v1786
    %1788 = vmatprep.subr.mxu0 0.0
    %1789 = vmatpush2.msra.mxu0 0.0
    %1790 = vmatprep.subr.mxu0 0.0
    %1791 = vmatpush2.msra.mxu0 0.0
    %1792 = vmatprep.subr.mxu0 0.0
    %1793 = vmatpush2.msra.mxu0 0.0
    %1794 = vmatprep.subr.mxu0 0.0
    %1795 = vmatpush2.msra.mxu0 0.0
    %1796 = vmatprep.subr.mxu0 0.0
    %1797 = vmatpush2.msra.mxu0 0.0
    %1798 = vmatprep.subr.mxu0 0.0
    %1799 = vmatpush2.msra.mxu0 0.0
    %1800 = vmatprep.subr.mxu0 0.0
    %1801 = vmatpush2.msra.mxu0 0.0
    %1802 = vmatprep.subr.mxu0 0.0
    %1803 = vmatpush2.msra.mxu0 0.0
    %1804 = vmatprep.subr.mxu0 0.0
    %1805 = vmatpush2.msra.mxu0 0.0
    %1806 = vmatprep.subr.mxu0 0.0
    %1807 = vmatpush2.msra.mxu0 0.0
    %1808 = vmatprep.subr.mxu0 0.0
    %1809 = vmatpush2.msra.mxu0 0.0
    %1810 = vmatprep.subr.mxu0 0.0
    %1811 = vmatpush2.msra.mxu0 0.0
    %1812 = vmatprep.subr.mxu0 0.0
    %1813 = vmatpush2.msra.mxu0 0.0
    %1814 = vmatprep.subr.mxu0 0.0
    %1815 = vmatpush2.msra.mxu0 0.0
    %1816 = vmatprep.subr.mxu0 0.0
    %1817 = vmatpush2.msra.mxu0 0.0
    %1818 = vmatprep.subr.mxu0 0.0
    %1819 = vmatpush2.msra.mxu0 0.0
    %1820 = vmatprep.mubr.f32.mxu0 0.0
    %v1821 = vand.u32 %v40, 4294901760
    %1822 = vmatmul.mubr.f32.gmra.mxu0 %v1821
    %v1823 = vpop.f32.mrf.mxu0
    %v1824 = vadd.f32 %v1647, %v1823
    %v1825 = vpop.f32.mrf.mxu0
    %v1826 = vadd.f32 %v1649, %v1825
    %1827 = vmatprep.mubr.f32.mxu0 0.0
    %v1828 = vand.u32 %v41, 4294901760
    %1829 = vmatmul.mubr.f32.gmra.mxu0 %v1828
    %v1830 = vpop.f32.mrf.mxu0
    %v1831 = vadd.f32 %v1656, %v1830
    %v1832 = vpop.f32.mrf.mxu0
    %v1833 = vadd.f32 %v1658, %v1832
    %1834 = vdwg.mxu0
    %v1835 = vand.u32 %v135, 4294901760
    %1836 = vmatprep.subr.mxu0 %v1835
    %v1837 = vand.u32 %v134, 4294901760
    %1838 = vmatpush1.msra.mxu0 %v1837
    %v1839 = vand.u32 %v129, 4294901760
    %1840 = vmatprep.subr.mxu0 %v1839
    %v1841 = vand.u32 %v128, 4294901760
    %1842 = vmatpush1.msra.mxu0 %v1841
    %v1843 = vand.u32 %v123, 4294901760
    %1844 = vmatprep.subr.mxu0 %v1843
    %v1845 = vand.u32 %v122, 4294901760
    %1846 = vmatpush1.msra.mxu0 %v1845
    %v1847 = vand.u32 %v117, 4294901760
    %1848 = vmatprep.subr.mxu0 %v1847
    %v1849 = vand.u32 %v116, 4294901760
    %1850 = vmatpush1.msra.mxu0 %v1849
    %v1851 = vand.u32 %v111, 4294901760
    %1852 = vmatprep.subr.mxu0 %v1851
    %v1853 = vand.u32 %v110, 4294901760
    %1854 = vmatpush1.msra.mxu0 %v1853
    %v1855 = vand.u32 %v105, 4294901760
    %1856 = vmatprep.subr.mxu0 %v1855
    %v1857 = vand.u32 %v104, 4294901760
    %1858 = vmatpush1.msra.mxu0 %v1857
    %v1859 = vand.u32 %v99, 4294901760
    %1860 = vmatprep.subr.mxu0 %v1859
    %v1861 = vand.u32 %v98, 4294901760
    %1862 = vmatpush1.msra.mxu0 %v1861
    %v1863 = vand.u32 %v93, 4294901760
    %1864 = vmatprep.subr.mxu0 %v1863
    %v1865 = vand.u32 %v92, 4294901760
    %1866 = vmatpush1.msra.mxu0 %v1865
    %v1867 = vand.u32 %v87, 4294901760
    %1868 = vmatprep.subr.mxu0 %v1867
    %v1869 = vand.u32 %v86, 4294901760
    %1870 = vmatpush1.msra.mxu0 %v1869
    %v1871 = vand.u32 %v81, 4294901760
    %1872 = vmatprep.subr.mxu0 %v1871
    %v1873 = vand.u32 %v80, 4294901760
    %1874 = vmatpush1.msra.mxu0 %v1873
    %v1875 = vand.u32 %v75, 4294901760
    %1876 = vmatprep.subr.mxu0 %v1875
    %v1877 = vand.u32 %v74, 4294901760
    %1878 = vmatpush1.msra.mxu0 %v1877
    %v1879 = vand.u32 %v69, 4294901760
    %1880 = vmatprep.subr.mxu0 %v1879
    %v1881 = vand.u32 %v68, 4294901760
    %1882 = vmatpush1.msra.mxu0 %v1881
    %v1883 = vand.u32 %v63, 4294901760
    %1884 = vmatprep.subr.mxu0 %v1883
    %v1885 = vand.u32 %v62, 4294901760
    %1886 = vmatpush1.msra.mxu0 %v1885
    %v1887 = vand.u32 %v57, 4294901760
    %1888 = vmatprep.subr.mxu0 %v1887
    %v1889 = vand.u32 %v56, 4294901760
    %1890 = vmatpush1.msra.mxu0 %v1889
    %v1891 = vand.u32 %v51, 4294901760
    %1892 = vmatprep.subr.mxu0 %v1891
    %v1893 = vand.u32 %v50, 4294901760
    %1894 = vmatpush1.msra.mxu0 %v1893
    %v1895 = vand.u32 %v45, 4294901760
    %1896 = vmatprep.subr.mxu0 %v1895
    %v1897 = vand.u32 %v44, 4294901760
    %1898 = vmatpush1.msra.mxu0 %v1897
    %1899 = vmatprep.subr.mxu0 0.0
    %1900 = vmatpush2.msra.mxu0 0.0
    %1901 = vmatprep.subr.mxu0 0.0
    %1902 = vmatpush2.msra.mxu0 0.0
    %1903 = vmatprep.subr.mxu0 0.0
    %1904 = vmatpush2.msra.mxu0 0.0
    %1905 = vmatprep.subr.mxu0 0.0
    %1906 = vmatpush2.msra.mxu0 0.0
    %1907 = vmatprep.subr.mxu0 0.0
    %1908 = vmatpush2.msra.mxu0 0.0
    %1909 = vmatprep.subr.mxu0 0.0
    %1910 = vmatpush2.msra.mxu0 0.0
    %1911 = vmatprep.subr.mxu0 0.0
    %1912 = vmatpush2.msra.mxu0 0.0
    %1913 = vmatprep.subr.mxu0 0.0
    %1914 = vmatpush2.msra.mxu0 0.0
    %1915 = vmatprep.subr.mxu0 0.0
    %1916 = vmatpush2.msra.mxu0 0.0
    %1917 = vmatprep.subr.mxu0 0.0
    %1918 = vmatpush2.msra.mxu0 0.0
    %1919 = vmatprep.subr.mxu0 0.0
    %1920 = vmatpush2.msra.mxu0 0.0
    %1921 = vmatprep.subr.mxu0 0.0
    %1922 = vmatpush2.msra.mxu0 0.0
    %1923 = vmatprep.subr.mxu0 0.0
    %1924 = vmatpush2.msra.mxu0 0.0
    %1925 = vmatprep.subr.mxu0 0.0
    %1926 = vmatpush2.msra.mxu0 0.0
    %1927 = vmatprep.subr.mxu0 0.0
    %1928 = vmatpush2.msra.mxu0 0.0
    %1929 = vmatprep.subr.mxu0 0.0
    %1930 = vmatpush2.msra.mxu0 0.0
    %1931 = vmatprep.mubr.f32.mxu0 0.0
    %v1932 = vand.u32 %v40, 4294901760
    %1933 = vmatmul.mubr.f32.gmra.mxu0 %v1932
    %v1934 = vpop.f32.mrf.mxu0
    %v1935 = vadd.f32 %v1824, %v1934
    %v1936 = vpop.f32.mrf.mxu0
    %v1937 = vadd.f32 %v1826, %v1936
    %1938 = vmatprep.mubr.f32.mxu0 0.0
    %v1939 = vand.u32 %v41, 4294901760
    %1940 = vmatmul.mubr.f32.gmra.mxu0 %v1939
    %v1941 = vpop.f32.mrf.mxu0
    %v1942 = vadd.f32 %v1831, %v1941
    %v1943 = vpop.f32.mrf.mxu0
    %v1944 = vadd.f32 %v1833, %v1943
    %1945 = vdwg.mxu0
    %v1946 = vand.u32 %v137, 4294901760
    %1947 = vmatprep.subr.mxu0 %v1946
    %v1948 = vand.u32 %v136, 4294901760
    %1949 = vmatpush1.msra.mxu0 %v1948
    %v1950 = vand.u32 %v131, 4294901760
    %1951 = vmatprep.subr.mxu0 %v1950
    %v1952 = vand.u32 %v130, 4294901760
    %1953 = vmatpush1.msra.mxu0 %v1952
    %v1954 = vand.u32 %v125, 4294901760
    %1955 = vmatprep.subr.mxu0 %v1954
    %v1956 = vand.u32 %v124, 4294901760
    %1957 = vmatpush1.msra.mxu0 %v1956
    %v1958 = vand.u32 %v119, 4294901760
    %1959 = vmatprep.subr.mxu0 %v1958
    %v1960 = vand.u32 %v118, 4294901760
    %1961 = vmatpush1.msra.mxu0 %v1960
    %v1962 = vand.u32 %v113, 4294901760
    %1963 = vmatprep.subr.mxu0 %v1962
    %v1964 = vand.u32 %v112, 4294901760
    %1965 = vmatpush1.msra.mxu0 %v1964
    %v1966 = vand.u32 %v107, 4294901760
    %1967 = vmatprep.subr.mxu0 %v1966
    %v1968 = vand.u32 %v106, 4294901760
    %1969 = vmatpush1.msra.mxu0 %v1968
    %v1970 = vand.u32 %v101, 4294901760
    %1971 = vmatprep.subr.mxu0 %v1970
    %v1972 = vand.u32 %v100, 4294901760
    %1973 = vmatpush1.msra.mxu0 %v1972
    %v1974 = vand.u32 %v95, 4294901760
    %1975 = vmatprep.subr.mxu0 %v1974
    %v1976 = vand.u32 %v94, 4294901760
    %1977 = vmatpush1.msra.mxu0 %v1976
    %v1978 = vand.u32 %v89, 4294901760
    %1979 = vmatprep.subr.mxu0 %v1978
    %v1980 = vand.u32 %v88, 4294901760
    %1981 = vmatpush1.msra.mxu0 %v1980
    %v1982 = vand.u32 %v83, 4294901760
    %1983 = vmatprep.subr.mxu0 %v1982
    %v1984 = vand.u32 %v82, 4294901760
    %1985 = vmatpush1.msra.mxu0 %v1984
    %v1986 = vand.u32 %v77, 4294901760
    %1987 = vmatprep.subr.mxu0 %v1986
    %v1988 = vand.u32 %v76, 4294901760
    %1989 = vmatpush1.msra.mxu0 %v1988
    %v1990 = vand.u32 %v71, 4294901760
    %1991 = vmatprep.subr.mxu0 %v1990
    %v1992 = vand.u32 %v70, 4294901760
    %1993 = vmatpush1.msra.mxu0 %v1992
    %v1994 = vand.u32 %v65, 4294901760
    %1995 = vmatprep.subr.mxu0 %v1994
    %v1996 = vand.u32 %v64, 4294901760
    %1997 = vmatpush1.msra.mxu0 %v1996
    %v1998 = vand.u32 %v59, 4294901760
    %1999 = vmatprep.subr.mxu0 %v1998
    %v2000 = vand.u32 %v58, 4294901760
    %2001 = vmatpush1.msra.mxu0 %v2000
    %v2002 = vand.u32 %v53, 4294901760
    %2003 = vmatprep.subr.mxu0 %v2002
    %v2004 = vand.u32 %v52, 4294901760
    %2005 = vmatpush1.msra.mxu0 %v2004
    %v2006 = vand.u32 %v47, 4294901760
    %2007 = vmatprep.subr.mxu0 %v2006
    %v2008 = vand.u32 %v46, 4294901760
    %2009 = vmatpush1.msra.mxu0 %v2008
    %2010 = vmatprep.subr.mxu0 0.0
    %2011 = vmatpush2.msra.mxu0 0.0
    %2012 = vmatprep.subr.mxu0 0.0
    %2013 = vmatpush2.msra.mxu0 0.0
    %2014 = vmatprep.subr.mxu0 0.0
    %2015 = vmatpush2.msra.mxu0 0.0
    %2016 = vmatprep.subr.mxu0 0.0
    %2017 = vmatpush2.msra.mxu0 0.0
    %2018 = vmatprep.subr.mxu0 0.0
    %2019 = vmatpush2.msra.mxu0 0.0
    %2020 = vmatprep.subr.mxu0 0.0
    %2021 = vmatpush2.msra.mxu0 0.0
    %2022 = vmatprep.subr.mxu0 0.0
    %2023 = vmatpush2.msra.mxu0 0.0
    %2024 = vmatprep.subr.mxu0 0.0
    %2025 = vmatpush2.msra.mxu0 0.0
    %2026 = vmatprep.subr.mxu0 0.0
    %2027 = vmatpush2.msra.mxu0 0.0
    %2028 = vmatprep.subr.mxu0 0.0
    %2029 = vmatpush2.msra.mxu0 0.0
    %2030 = vmatprep.subr.mxu0 0.0
    %2031 = vmatpush2.msra.mxu0 0.0
    %2032 = vmatprep.subr.mxu0 0.0
    %2033 = vmatpush2.msra.mxu0 0.0
    %2034 = vmatprep.subr.mxu0 0.0
    %2035 = vmatpush2.msra.mxu0 0.0
    %2036 = vmatprep.subr.mxu0 0.0
    %2037 = vmatpush2.msra.mxu0 0.0
    %2038 = vmatprep.subr.mxu0 0.0
    %2039 = vmatpush2.msra.mxu0 0.0
    %2040 = vmatprep.subr.mxu0 0.0
    %2041 = vmatpush2.msra.mxu0 0.0
    %2042 = vmatprep.mubr.f32.mxu0 0.0
    %v2043 = vand.u32 %v40, 4294901760
    %v2044 = vsub.f32 %v40, %v2043
    %v2045 = vand.u32 %v2044, 4294901760
    %v2046 = vsub.f32 %v2044, %v2045
    %v2047 = vand.u32 %v2046, 4294901760
    %2048 = vmatmul.mubr.f32.gmra.mxu0 %v2047
    %v2049 = vpop.f32.mrf.mxu0
    %v2050 = vadd.f32 0.0, %v2049
    %v2051 = vpop.f32.mrf.mxu0
    %v2052 = vadd.f32 0.0, %v2051
    %2053 = vmatprep.mubr.f32.mxu0 0.0
    %v2054 = vand.u32 %v41, 4294901760
    %v2055 = vsub.f32 %v41, %v2054
    %v2056 = vand.u32 %v2055, 4294901760
    %v2057 = vsub.f32 %v2055, %v2056
    %v2058 = vand.u32 %v2057, 4294901760
    %2059 = vmatmul.mubr.f32.gmra.mxu0 %v2058
    %v2060 = vpop.f32.mrf.mxu0
    %v2061 = vadd.f32 0.0, %v2060
    %v2062 = vpop.f32.mrf.mxu0
    %v2063 = vadd.f32 0.0, %v2062
    %2064 = vdwg.mxu0
    %v2065 = vand.u32 %v137, 4294901760
    %v2066 = vsub.f32 %v137, %v2065
    %v2067 = vand.u32 %v2066, 4294901760
    %v2068 = vsub.f32 %v2066, %v2067
    %v2069 = vand.u32 %v2068, 4294901760
    %2070 = vmatprep.subr.mxu0 %v2069
    %v2071 = vand.u32 %v136, 4294901760
    %v2072 = vsub.f32 %v136, %v2071
    %v2073 = vand.u32 %v2072, 4294901760
    %v2074 = vsub.f32 %v2072, %v2073
    %v2075 = vand.u32 %v2074, 4294901760
    %2076 = vmatpush1.msra.mxu0 %v2075
    %v2077 = vand.u32 %v131, 4294901760
    %v2078 = vsub.f32 %v131, %v2077
    %v2079 = vand.u32 %v2078, 4294901760
    %v2080 = vsub.f32 %v2078, %v2079
    %v2081 = vand.u32 %v2080, 4294901760
    %2082 = vmatprep.subr.mxu0 %v2081
    %v2083 = vand.u32 %v130, 4294901760
    %v2084 = vsub.f32 %v130, %v2083
    %v2085 = vand.u32 %v2084, 4294901760
    %v2086 = vsub.f32 %v2084, %v2085
    %v2087 = vand.u32 %v2086, 4294901760
    %2088 = vmatpush1.msra.mxu0 %v2087
    %v2089 = vand.u32 %v125, 4294901760
    %v2090 = vsub.f32 %v125, %v2089
    %v2091 = vand.u32 %v2090, 4294901760
    %v2092 = vsub.f32 %v2090, %v2091
    %v2093 = vand.u32 %v2092, 4294901760
    %2094 = vmatprep.subr.mxu0 %v2093
    %v2095 = vand.u32 %v124, 4294901760
    %v2096 = vsub.f32 %v124, %v2095
    %v2097 = vand.u32 %v2096, 4294901760
    %v2098 = vsub.f32 %v2096, %v2097
    %v2099 = vand.u32 %v2098, 4294901760
    %2100 = vmatpush1.msra.mxu0 %v2099
    %v2101 = vand.u32 %v119, 4294901760
    %v2102 = vsub.f32 %v119, %v2101
    %v2103 = vand.u32 %v2102, 4294901760
    %v2104 = vsub.f32 %v2102, %v2103
    %v2105 = vand.u32 %v2104, 4294901760
    %2106 = vmatprep.subr.mxu0 %v2105
    %v2107 = vand.u32 %v118, 4294901760
    %v2108 = vsub.f32 %v118, %v2107
    %v2109 = vand.u32 %v2108, 4294901760
    %v2110 = vsub.f32 %v2108, %v2109
    %v2111 = vand.u32 %v2110, 4294901760
    %2112 = vmatpush1.msra.mxu0 %v2111
    %v2113 = vand.u32 %v113, 4294901760
    %v2114 = vsub.f32 %v113, %v2113
    %v2115 = vand.u32 %v2114, 4294901760
    %v2116 = vsub.f32 %v2114, %v2115
    %v2117 = vand.u32 %v2116, 4294901760
    %2118 = vmatprep.subr.mxu0 %v2117
    %v2119 = vand.u32 %v112, 4294901760
    %v2120 = vsub.f32 %v112, %v2119
    %v2121 = vand.u32 %v2120, 4294901760
    %v2122 = vsub.f32 %v2120, %v2121
    %v2123 = vand.u32 %v2122, 4294901760
    %2124 = vmatpush1.msra.mxu0 %v2123
    %v2125 = vand.u32 %v107, 4294901760
    %v2126 = vsub.f32 %v107, %v2125
    %v2127 = vand.u32 %v2126, 4294901760
    %v2128 = vsub.f32 %v2126, %v2127
    %v2129 = vand.u32 %v2128, 4294901760
    %2130 = vmatprep.subr.mxu0 %v2129
    %v2131 = vand.u32 %v106, 4294901760
    %v2132 = vsub.f32 %v106, %v2131
    %v2133 = vand.u32 %v2132, 4294901760
    %v2134 = vsub.f32 %v2132, %v2133
    %v2135 = vand.u32 %v2134, 4294901760
    %2136 = vmatpush1.msra.mxu0 %v2135
    %v2137 = vand.u32 %v101, 4294901760
    %v2138 = vsub.f32 %v101, %v2137
    %v2139 = vand.u32 %v2138, 4294901760
    %v2140 = vsub.f32 %v2138, %v2139
    %v2141 = vand.u32 %v2140, 4294901760
    %2142 = vmatprep.subr.mxu0 %v2141
    %v2143 = vand.u32 %v100, 4294901760
    %v2144 = vsub.f32 %v100, %v2143
    %v2145 = vand.u32 %v2144, 4294901760
    %v2146 = vsub.f32 %v2144, %v2145
    %v2147 = vand.u32 %v2146, 4294901760
    %2148 = vmatpush1.msra.mxu0 %v2147
    %v2149 = vand.u32 %v95, 4294901760
    %v2150 = vsub.f32 %v95, %v2149
    %v2151 = vand.u32 %v2150, 4294901760
    %v2152 = vsub.f32 %v2150, %v2151
    %v2153 = vand.u32 %v2152, 4294901760
    %2154 = vmatprep.subr.mxu0 %v2153
    %v2155 = vand.u32 %v94, 4294901760
    %v2156 = vsub.f32 %v94, %v2155
    %v2157 = vand.u32 %v2156, 4294901760
    %v2158 = vsub.f32 %v2156, %v2157
    %v2159 = vand.u32 %v2158, 4294901760
    %2160 = vmatpush1.msra.mxu0 %v2159
    %v2161 = vand.u32 %v89, 4294901760
    %v2162 = vsub.f32 %v89, %v2161
    %v2163 = vand.u32 %v2162, 4294901760
    %v2164 = vsub.f32 %v2162, %v2163
    %v2165 = vand.u32 %v2164, 4294901760
    %2166 = vmatprep.subr.mxu0 %v2165
    %v2167 = vand.u32 %v88, 4294901760
    %v2168 = vsub.f32 %v88, %v2167
    %v2169 = vand.u32 %v2168, 4294901760
    %v2170 = vsub.f32 %v2168, %v2169
    %v2171 = vand.u32 %v2170, 4294901760
    %2172 = vmatpush1.msra.mxu0 %v2171
    %v2173 = vand.u32 %v83, 4294901760
    %v2174 = vsub.f32 %v83, %v2173
    %v2175 = vand.u32 %v2174, 4294901760
    %v2176 = vsub.f32 %v2174, %v2175
    %v2177 = vand.u32 %v2176, 4294901760
    %2178 = vmatprep.subr.mxu0 %v2177
    %v2179 = vand.u32 %v82, 4294901760
    %v2180 = vsub.f32 %v82, %v2179
    %v2181 = vand.u32 %v2180, 4294901760
    %v2182 = vsub.f32 %v2180, %v2181
    %v2183 = vand.u32 %v2182, 4294901760
    %2184 = vmatpush1.msra.mxu0 %v2183
    %v2185 = vand.u32 %v77, 4294901760
    %v2186 = vsub.f32 %v77, %v2185
    %v2187 = vand.u32 %v2186, 4294901760
    %v2188 = vsub.f32 %v2186, %v2187
    %v2189 = vand.u32 %v2188, 4294901760
    %2190 = vmatprep.subr.mxu0 %v2189
    %v2191 = vand.u32 %v76, 4294901760
    %v2192 = vsub.f32 %v76, %v2191
    %v2193 = vand.u32 %v2192, 4294901760
    %v2194 = vsub.f32 %v2192, %v2193
    %v2195 = vand.u32 %v2194, 4294901760
    %2196 = vmatpush1.msra.mxu0 %v2195
    %v2197 = vand.u32 %v71, 4294901760
    %v2198 = vsub.f32 %v71, %v2197
    %v2199 = vand.u32 %v2198, 4294901760
    %v2200 = vsub.f32 %v2198, %v2199
    %v2201 = vand.u32 %v2200, 4294901760
    %2202 = vmatprep.subr.mxu0 %v2201
    %v2203 = vand.u32 %v70, 4294901760
    %v2204 = vsub.f32 %v70, %v2203
    %v2205 = vand.u32 %v2204, 4294901760
    %v2206 = vsub.f32 %v2204, %v2205
    %v2207 = vand.u32 %v2206, 4294901760
    %2208 = vmatpush1.msra.mxu0 %v2207
    %v2209 = vand.u32 %v65, 4294901760
    %v2210 = vsub.f32 %v65, %v2209
    %v2211 = vand.u32 %v2210, 4294901760
    %v2212 = vsub.f32 %v2210, %v2211
    %v2213 = vand.u32 %v2212, 4294901760
    %2214 = vmatprep.subr.mxu0 %v2213
    %v2215 = vand.u32 %v64, 4294901760
    %v2216 = vsub.f32 %v64, %v2215
    %v2217 = vand.u32 %v2216, 4294901760
    %v2218 = vsub.f32 %v2216, %v2217
    %v2219 = vand.u32 %v2218, 4294901760
    %2220 = vmatpush1.msra.mxu0 %v2219
    %v2221 = vand.u32 %v59, 4294901760
    %v2222 = vsub.f32 %v59, %v2221
    %v2223 = vand.u32 %v2222, 4294901760
    %v2224 = vsub.f32 %v2222, %v2223
    %v2225 = vand.u32 %v2224, 4294901760
    %2226 = vmatprep.subr.mxu0 %v2225
    %v2227 = vand.u32 %v58, 4294901760
    %v2228 = vsub.f32 %v58, %v2227
    %v2229 = vand.u32 %v2228, 4294901760
    %v2230 = vsub.f32 %v2228, %v2229
    %v2231 = vand.u32 %v2230, 4294901760
    %2232 = vmatpush1.msra.mxu0 %v2231
    %v2233 = vand.u32 %v53, 4294901760
    %v2234 = vsub.f32 %v53, %v2233
    %v2235 = vand.u32 %v2234, 4294901760
    %v2236 = vsub.f32 %v2234, %v2235
    %v2237 = vand.u32 %v2236, 4294901760
    %2238 = vmatprep.subr.mxu0 %v2237
    %v2239 = vand.u32 %v52, 4294901760
    %v2240 = vsub.f32 %v52, %v2239
    %v2241 = vand.u32 %v2240, 4294901760
    %v2242 = vsub.f32 %v2240, %v2241
    %v2243 = vand.u32 %v2242, 4294901760
    %2244 = vmatpush1.msra.mxu0 %v2243
    %v2245 = vand.u32 %v47, 4294901760
    %v2246 = vsub.f32 %v47, %v2245
    %v2247 = vand.u32 %v2246, 4294901760
    %v2248 = vsub.f32 %v2246, %v2247
    %v2249 = vand.u32 %v2248, 4294901760
    %2250 = vmatprep.subr.mxu0 %v2249
    %v2251 = vand.u32 %v46, 4294901760
    %v2252 = vsub.f32 %v46, %v2251
    %v2253 = vand.u32 %v2252, 4294901760
    %v2254 = vsub.f32 %v2252, %v2253
    %v2255 = vand.u32 %v2254, 4294901760
    %2256 = vmatpush1.msra.mxu0 %v2255
    %2257 = vmatprep.subr.mxu0 0.0
    %2258 = vmatpush2.msra.mxu0 0.0
    %2259 = vmatprep.subr.mxu0 0.0
    %2260 = vmatpush2.msra.mxu0 0.0
    %2261 = vmatprep.subr.mxu0 0.0
    %2262 = vmatpush2.msra.mxu0 0.0
    %2263 = vmatprep.subr.mxu0 0.0
    %2264 = vmatpush2.msra.mxu0 0.0
    %2265 = vmatprep.subr.mxu0 0.0
    %2266 = vmatpush2.msra.mxu0 0.0
    %2267 = vmatprep.subr.mxu0 0.0
    %2268 = vmatpush2.msra.mxu0 0.0
    %2269 = vmatprep.subr.mxu0 0.0
    %2270 = vmatpush2.msra.mxu0 0.0
    %2271 = vmatprep.subr.mxu0 0.0
    %2272 = vmatpush2.msra.mxu0 0.0
    %2273 = vmatprep.subr.mxu0 0.0
    %2274 = vmatpush2.msra.mxu0 0.0
    %2275 = vmatprep.subr.mxu0 0.0
    %2276 = vmatpush2.msra.mxu0 0.0
    %2277 = vmatprep.subr.mxu0 0.0
    %2278 = vmatpush2.msra.mxu0 0.0
    %2279 = vmatprep.subr.mxu0 0.0
    %2280 = vmatpush2.msra.mxu0 0.0
    %2281 = vmatprep.subr.mxu0 0.0
    %2282 = vmatpush2.msra.mxu0 0.0
    %2283 = vmatprep.subr.mxu0 0.0
    %2284 = vmatpush2.msra.mxu0 0.0
    %2285 = vmatprep.subr.mxu0 0.0
    %2286 = vmatpush2.msra.mxu0 0.0
    %2287 = vmatprep.subr.mxu0 0.0
    %2288 = vmatpush2.msra.mxu0 0.0
    %2289 = vmatprep.mubr.f32.mxu0 0.0
    %v2290 = vand.u32 %v40, 4294901760
    %2291 = vmatmul.mubr.f32.gmra.mxu0 %v2290
    %v2292 = vpop.f32.mrf.mxu0
    %v2293 = vadd.f32 %v2050, %v2292
    %v2294 = vpop.f32.mrf.mxu0
    %v2295 = vadd.f32 %v2052, %v2294
    %2296 = vmatprep.mubr.f32.mxu0 0.0
    %v2297 = vand.u32 %v41, 4294901760
    %2298 = vmatmul.mubr.f32.gmra.mxu0 %v2297
    %v2299 = vpop.f32.mrf.mxu0
    %v2300 = vadd.f32 %v2061, %v2299
    %v2301 = vpop.f32.mrf.mxu0
    %v2302 = vadd.f32 %v2063, %v2301
    %2303 = vdwg.mxu0
    %v2304 = vand.u32 %v137, 4294901760
    %v2305 = vsub.f32 %v137, %v2304
    %2306 = vmatprep.subr.mxu0 %v2305
    %v2307 = vand.u32 %v136, 4294901760
    %v2308 = vsub.f32 %v136, %v2307
    %2309 = vmatpush1.msra.mxu0 %v2308
    %v2310 = vand.u32 %v131, 4294901760
    %v2311 = vsub.f32 %v131, %v2310
    %2312 = vmatprep.subr.mxu0 %v2311
    %v2313 = vand.u32 %v130, 4294901760
    %v2314 = vsub.f32 %v130, %v2313
    %2315 = vmatpush1.msra.mxu0 %v2314
    %v2316 = vand.u32 %v125, 4294901760
    %v2317 = vsub.f32 %v125, %v2316
    %2318 = vmatprep.subr.mxu0 %v2317
    %v2319 = vand.u32 %v124, 4294901760
    %v2320 = vsub.f32 %v124, %v2319
    %2321 = vmatpush1.msra.mxu0 %v2320
    %v2322 = vand.u32 %v119, 4294901760
    %v2323 = vsub.f32 %v119, %v2322
    %2324 = vmatprep.subr.mxu0 %v2323
    %v2325 = vand.u32 %v118, 4294901760
    %v2326 = vsub.f32 %v118, %v2325
    %2327 = vmatpush1.msra.mxu0 %v2326
    %v2328 = vand.u32 %v113, 4294901760
    %v2329 = vsub.f32 %v113, %v2328
    %2330 = vmatprep.subr.mxu0 %v2329
    %v2331 = vand.u32 %v112, 4294901760
    %v2332 = vsub.f32 %v112, %v2331
    %2333 = vmatpush1.msra.mxu0 %v2332
    %v2334 = vand.u32 %v107, 4294901760
    %v2335 = vsub.f32 %v107, %v2334
    %2336 = vmatprep.subr.mxu0 %v2335
    %v2337 = vand.u32 %v106, 4294901760
    %v2338 = vsub.f32 %v106, %v2337
    %2339 = vmatpush1.msra.mxu0 %v2338
    %v2340 = vand.u32 %v101, 4294901760
    %v2341 = vsub.f32 %v101, %v2340
    %2342 = vmatprep.subr.mxu0 %v2341
    %v2343 = vand.u32 %v100, 4294901760
    %v2344 = vsub.f32 %v100, %v2343
    %2345 = vmatpush1.msra.mxu0 %v2344
    %v2346 = vand.u32 %v95, 4294901760
    %v2347 = vsub.f32 %v95, %v2346
    %2348 = vmatprep.subr.mxu0 %v2347
    %v2349 = vand.u32 %v94, 4294901760
    %v2350 = vsub.f32 %v94, %v2349
    %2351 = vmatpush1.msra.mxu0 %v2350
    %v2352 = vand.u32 %v89, 4294901760
    %v2353 = vsub.f32 %v89, %v2352
    %2354 = vmatprep.subr.mxu0 %v2353
    %v2355 = vand.u32 %v88, 4294901760
    %v2356 = vsub.f32 %v88, %v2355
    %2357 = vmatpush1.msra.mxu0 %v2356
    %v2358 = vand.u32 %v83, 4294901760
    %v2359 = vsub.f32 %v83, %v2358
    %2360 = vmatprep.subr.mxu0 %v2359
    %v2361 = vand.u32 %v82, 4294901760
    %v2362 = vsub.f32 %v82, %v2361
    %2363 = vmatpush1.msra.mxu0 %v2362
    %v2364 = vand.u32 %v77, 4294901760
    %v2365 = vsub.f32 %v77, %v2364
    %2366 = vmatprep.subr.mxu0 %v2365
    %v2367 = vand.u32 %v76, 4294901760
    %v2368 = vsub.f32 %v76, %v2367
    %2369 = vmatpush1.msra.mxu0 %v2368
    %v2370 = vand.u32 %v71, 4294901760
    %v2371 = vsub.f32 %v71, %v2370
    %2372 = vmatprep.subr.mxu0 %v2371
    %v2373 = vand.u32 %v70, 4294901760
    %v2374 = vsub.f32 %v70, %v2373
    %2375 = vmatpush1.msra.mxu0 %v2374
    %v2376 = vand.u32 %v65, 4294901760
    %v2377 = vsub.f32 %v65, %v2376
    %2378 = vmatprep.subr.mxu0 %v2377
    %v2379 = vand.u32 %v64, 4294901760
    %v2380 = vsub.f32 %v64, %v2379
    %2381 = vmatpush1.msra.mxu0 %v2380
    %v2382 = vand.u32 %v59, 4294901760
    %v2383 = vsub.f32 %v59, %v2382
    %2384 = vmatprep.subr.mxu0 %v2383
    %v2385 = vand.u32 %v58, 4294901760
    %v2386 = vsub.f32 %v58, %v2385
    %2387 = vmatpush1.msra.mxu0 %v2386
    %v2388 = vand.u32 %v53, 4294901760
    %v2389 = vsub.f32 %v53, %v2388
    %2390 = vmatprep.subr.mxu0 %v2389
    %v2391 = vand.u32 %v52, 4294901760
    %v2392 = vsub.f32 %v52, %v2391
    %2393 = vmatpush1.msra.mxu0 %v2392
    %v2394 = vand.u32 %v47, 4294901760
    %v2395 = vsub.f32 %v47, %v2394
    %2396 = vmatprep.subr.mxu0 %v2395
    %v2397 = vand.u32 %v46, 4294901760
    %v2398 = vsub.f32 %v46, %v2397
    %2399 = vmatpush1.msra.mxu0 %v2398
    %2400 = vmatprep.subr.mxu0 0.0
    %2401 = vmatpush2.msra.mxu0 0.0
    %2402 = vmatprep.subr.mxu0 0.0
    %2403 = vmatpush2.msra.mxu0 0.0
    %2404 = vmatprep.subr.mxu0 0.0
    %2405 = vmatpush2.msra.mxu0 0.0
    %2406 = vmatprep.subr.mxu0 0.0
    %2407 = vmatpush2.msra.mxu0 0.0
    %2408 = vmatprep.subr.mxu0 0.0
    %2409 = vmatpush2.msra.mxu0 0.0
    %2410 = vmatprep.subr.mxu0 0.0
    %2411 = vmatpush2.msra.mxu0 0.0
    %2412 = vmatprep.subr.mxu0 0.0
    %2413 = vmatpush2.msra.mxu0 0.0
    %2414 = vmatprep.subr.mxu0 0.0
    %2415 = vmatpush2.msra.mxu0 0.0
    %2416 = vmatprep.subr.mxu0 0.0
    %2417 = vmatpush2.msra.mxu0 0.0
    %2418 = vmatprep.subr.mxu0 0.0
    %2419 = vmatpush2.msra.mxu0 0.0
    %2420 = vmatprep.subr.mxu0 0.0
    %2421 = vmatpush2.msra.mxu0 0.0
    %2422 = vmatprep.subr.mxu0 0.0
    %2423 = vmatpush2.msra.mxu0 0.0
    %2424 = vmatprep.subr.mxu0 0.0
    %2425 = vmatpush2.msra.mxu0 0.0
    %2426 = vmatprep.subr.mxu0 0.0
    %2427 = vmatpush2.msra.mxu0 0.0
    %2428 = vmatprep.subr.mxu0 0.0
    %2429 = vmatpush2.msra.mxu0 0.0
    %2430 = vmatprep.subr.mxu0 0.0
    %2431 = vmatpush2.msra.mxu0 0.0
    %2432 = vmatprep.mubr.f32.mxu0 0.0
    %v2433 = vand.u32 %v40, 4294901760
    %v2434 = vsub.f32 %v40, %v2433
    %2435 = vmatmul.mubr.f32.gmra.mxu0 %v2434
    %v2436 = vpop.f32.mrf.mxu0
    %v2437 = vadd.f32 %v2293, %v2436
    %v2438 = vpop.f32.mrf.mxu0
    %v2439 = vadd.f32 %v2295, %v2438
    %2440 = vmatprep.mubr.f32.mxu0 0.0
    %v2441 = vand.u32 %v41, 4294901760
    %v2442 = vsub.f32 %v41, %v2441
    %2443 = vmatmul.mubr.f32.gmra.mxu0 %v2442
    %v2444 = vpop.f32.mrf.mxu0
    %v2445 = vadd.f32 %v2300, %v2444
    %v2446 = vpop.f32.mrf.mxu0
    %v2447 = vadd.f32 %v2302, %v2446
    %2448 = vdwg.mxu0
    %v2449 = vand.u32 %v137, 4294901760
    %2450 = vmatprep.subr.mxu0 %v2449
    %v2451 = vand.u32 %v136, 4294901760
    %2452 = vmatpush1.msra.mxu0 %v2451
    %v2453 = vand.u32 %v131, 4294901760
    %2454 = vmatprep.subr.mxu0 %v2453
    %v2455 = vand.u32 %v130, 4294901760
    %2456 = vmatpush1.msra.mxu0 %v2455
    %v2457 = vand.u32 %v125, 4294901760
    %2458 = vmatprep.subr.mxu0 %v2457
    %v2459 = vand.u32 %v124, 4294901760
    %2460 = vmatpush1.msra.mxu0 %v2459
    %v2461 = vand.u32 %v119, 4294901760
    %2462 = vmatprep.subr.mxu0 %v2461
    %v2463 = vand.u32 %v118, 4294901760
    %2464 = vmatpush1.msra.mxu0 %v2463
    %v2465 = vand.u32 %v113, 4294901760
    %2466 = vmatprep.subr.mxu0 %v2465
    %v2467 = vand.u32 %v112, 4294901760
    %2468 = vmatpush1.msra.mxu0 %v2467
    %v2469 = vand.u32 %v107, 4294901760
    %2470 = vmatprep.subr.mxu0 %v2469
    %v2471 = vand.u32 %v106, 4294901760
    %2472 = vmatpush1.msra.mxu0 %v2471
    %v2473 = vand.u32 %v101, 4294901760
    %2474 = vmatprep.subr.mxu0 %v2473
    %v2475 = vand.u32 %v100, 4294901760
    %2476 = vmatpush1.msra.mxu0 %v2475
    %v2477 = vand.u32 %v95, 4294901760
    %2478 = vmatprep.subr.mxu0 %v2477
    %v2479 = vand.u32 %v94, 4294901760
    %2480 = vmatpush1.msra.mxu0 %v2479
    %v2481 = vand.u32 %v89, 4294901760
    %2482 = vmatprep.subr.mxu0 %v2481
    %v2483 = vand.u32 %v88, 4294901760
    %2484 = vmatpush1.msra.mxu0 %v2483
    %v2485 = vand.u32 %v83, 4294901760
    %2486 = vmatprep.subr.mxu0 %v2485
    %v2487 = vand.u32 %v82, 4294901760
    %2488 = vmatpush1.msra.mxu0 %v2487
    %v2489 = vand.u32 %v77, 4294901760
    %2490 = vmatprep.subr.mxu0 %v2489
    %v2491 = vand.u32 %v76, 4294901760
    %2492 = vmatpush1.msra.mxu0 %v2491
    %v2493 = vand.u32 %v71, 4294901760
    %2494 = vmatprep.subr.mxu0 %v2493
    %v2495 = vand.u32 %v70, 4294901760
    %2496 = vmatpush1.msra.mxu0 %v2495
    %v2497 = vand.u32 %v65, 4294901760
    %2498 = vmatprep.subr.mxu0 %v2497
    %v2499 = vand.u32 %v64, 4294901760
    %2500 = vmatpush1.msra.mxu0 %v2499
    %v2501 = vand.u32 %v59, 4294901760
    %2502 = vmatprep.subr.mxu0 %v2501
    %v2503 = vand.u32 %v58, 4294901760
    %2504 = vmatpush1.msra.mxu0 %v2503
    %v2505 = vand.u32 %v53, 4294901760
    %2506 = vmatprep.subr.mxu0 %v2505
    %v2507 = vand.u32 %v52, 4294901760
    %2508 = vmatpush1.msra.mxu0 %v2507
    %v2509 = vand.u32 %v47, 4294901760
    %2510 = vmatprep.subr.mxu0 %v2509
    %v2511 = vand.u32 %v46, 4294901760
    %2512 = vmatpush1.msra.mxu0 %v2511
    %2513 = vmatprep.subr.mxu0 0.0
    %2514 = vmatpush2.msra.mxu0 0.0
    %2515 = vmatprep.subr.mxu0 0.0
    %2516 = vmatpush2.msra.mxu0 0.0
    %2517 = vmatprep.subr.mxu0 0.0
    %2518 = vmatpush2.msra.mxu0 0.0
    %2519 = vmatprep.subr.mxu0 0.0
    %2520 = vmatpush2.msra.mxu0 0.0
    %2521 = vmatprep.subr.mxu0 0.0
    %2522 = vmatpush2.msra.mxu0 0.0
    %2523 = vmatprep.subr.mxu0 0.0
    %2524 = vmatpush2.msra.mxu0 0.0
    %2525 = vmatprep.subr.mxu0 0.0
    %2526 = vmatpush2.msra.mxu0 0.0
    %2527 = vmatprep.subr.mxu0 0.0
    %2528 = vmatpush2.msra.mxu0 0.0
    %2529 = vmatprep.subr.mxu0 0.0
    %2530 = vmatpush2.msra.mxu0 0.0
    %2531 = vmatprep.subr.mxu0 0.0
    %2532 = vmatpush2.msra.mxu0 0.0
    %2533 = vmatprep.subr.mxu0 0.0
    %2534 = vmatpush2.msra.mxu0 0.0
    %2535 = vmatprep.subr.mxu0 0.0
    %2536 = vmatpush2.msra.mxu0 0.0
    %2537 = vmatprep.subr.mxu0 0.0
    %2538 = vmatpush2.msra.mxu0 0.0
    %2539 = vmatprep.subr.mxu0 0.0
    %2540 = vmatpush2.msra.mxu0 0.0
    %2541 = vmatprep.subr.mxu0 0.0
    %2542 = vmatpush2.msra.mxu0 0.0
    %2543 = vmatprep.subr.mxu0 0.0
    %2544 = vmatpush2.msra.mxu0 0.0
    %2545 = vmatprep.mubr.f32.mxu0 0.0
    %v2546 = vand.u32 %v40, 4294901760
    %v2547 = vsub.f32 %v40, %v2546
    %v2548 = vand.u32 %v2547, 4294901760
    %2549 = vmatmul.mubr.f32.gmra.mxu0 %v2548
    %v2550 = vpop.f32.mrf.mxu0
    %v2551 = vadd.f32 %v2437, %v2550
    %v2552 = vpop.f32.mrf.mxu0
    %v2553 = vadd.f32 %v2439, %v2552
    %2554 = vmatprep.mubr.f32.mxu0 0.0
    %v2555 = vand.u32 %v41, 4294901760
    %v2556 = vsub.f32 %v41, %v2555
    %v2557 = vand.u32 %v2556, 4294901760
    %2558 = vmatmul.mubr.f32.gmra.mxu0 %v2557
    %v2559 = vpop.f32.mrf.mxu0
    %v2560 = vadd.f32 %v2445, %v2559
    %v2561 = vpop.f32.mrf.mxu0
    %v2562 = vadd.f32 %v2447, %v2561
    %2563 = vdwg.mxu0
    %v2564 = vand.u32 %v137, 4294901760
    %v2565 = vsub.f32 %v137, %v2564
    %v2566 = vand.u32 %v2565, 4294901760
    %2567 = vmatprep.subr.mxu0 %v2566
    %v2568 = vand.u32 %v136, 4294901760
    %v2569 = vsub.f32 %v136, %v2568
    %v2570 = vand.u32 %v2569, 4294901760
    %2571 = vmatpush1.msra.mxu0 %v2570
    %v2572 = vand.u32 %v131, 4294901760
    %v2573 = vsub.f32 %v131, %v2572
    %v2574 = vand.u32 %v2573, 4294901760
    %2575 = vmatprep.subr.mxu0 %v2574
    %v2576 = vand.u32 %v130, 4294901760
    %v2577 = vsub.f32 %v130, %v2576
    %v2578 = vand.u32 %v2577, 4294901760
    %2579 = vmatpush1.msra.mxu0 %v2578
    %v2580 = vand.u32 %v125, 4294901760
    %v2581 = vsub.f32 %v125, %v2580
    %v2582 = vand.u32 %v2581, 4294901760
    %2583 = vmatprep.subr.mxu0 %v2582
    %v2584 = vand.u32 %v124, 4294901760
    %v2585 = vsub.f32 %v124, %v2584
    %v2586 = vand.u32 %v2585, 4294901760
    %2587 = vmatpush1.msra.mxu0 %v2586
    %v2588 = vand.u32 %v119, 4294901760
    %v2589 = vsub.f32 %v119, %v2588
    %v2590 = vand.u32 %v2589, 4294901760
    %2591 = vmatprep.subr.mxu0 %v2590
    %v2592 = vand.u32 %v118, 4294901760
    %v2593 = vsub.f32 %v118, %v2592
    %v2594 = vand.u32 %v2593, 4294901760
    %2595 = vmatpush1.msra.mxu0 %v2594
    %v2596 = vand.u32 %v113, 4294901760
    %v2597 = vsub.f32 %v113, %v2596
    %v2598 = vand.u32 %v2597, 4294901760
    %2599 = vmatprep.subr.mxu0 %v2598
    %v2600 = vand.u32 %v112, 4294901760
    %v2601 = vsub.f32 %v112, %v2600
    %v2602 = vand.u32 %v2601, 4294901760
    %2603 = vmatpush1.msra.mxu0 %v2602
    %v2604 = vand.u32 %v107, 4294901760
    %v2605 = vsub.f32 %v107, %v2604
    %v2606 = vand.u32 %v2605, 4294901760
    %2607 = vmatprep.subr.mxu0 %v2606
    %v2608 = vand.u32 %v106, 4294901760
    %v2609 = vsub.f32 %v106, %v2608
    %v2610 = vand.u32 %v2609, 4294901760
    %2611 = vmatpush1.msra.mxu0 %v2610
    %v2612 = vand.u32 %v101, 4294901760
    %v2613 = vsub.f32 %v101, %v2612
    %v2614 = vand.u32 %v2613, 4294901760
    %2615 = vmatprep.subr.mxu0 %v2614
    %v2616 = vand.u32 %v100, 4294901760
    %v2617 = vsub.f32 %v100, %v2616
    %v2618 = vand.u32 %v2617, 4294901760
    %2619 = vmatpush1.msra.mxu0 %v2618
    %v2620 = vand.u32 %v95, 4294901760
    %v2621 = vsub.f32 %v95, %v2620
    %v2622 = vand.u32 %v2621, 4294901760
    %2623 = vmatprep.subr.mxu0 %v2622
    %v2624 = vand.u32 %v94, 4294901760
    %v2625 = vsub.f32 %v94, %v2624
    %v2626 = vand.u32 %v2625, 4294901760
    %2627 = vmatpush1.msra.mxu0 %v2626
    %v2628 = vand.u32 %v89, 4294901760
    %v2629 = vsub.f32 %v89, %v2628
    %v2630 = vand.u32 %v2629, 4294901760
    %2631 = vmatprep.subr.mxu0 %v2630
    %v2632 = vand.u32 %v88, 4294901760
    %v2633 = vsub.f32 %v88, %v2632
    %v2634 = vand.u32 %v2633, 4294901760
    %2635 = vmatpush1.msra.mxu0 %v2634
    %v2636 = vand.u32 %v83, 4294901760
    %v2637 = vsub.f32 %v83, %v2636
    %v2638 = vand.u32 %v2637, 4294901760
    %2639 = vmatprep.subr.mxu0 %v2638
    %v2640 = vand.u32 %v82, 4294901760
    %v2641 = vsub.f32 %v82, %v2640
    %v2642 = vand.u32 %v2641, 4294901760
    %2643 = vmatpush1.msra.mxu0 %v2642
    %v2644 = vand.u32 %v77, 4294901760
    %v2645 = vsub.f32 %v77, %v2644
    %v2646 = vand.u32 %v2645, 4294901760
    %2647 = vmatprep.subr.mxu0 %v2646
    %v2648 = vand.u32 %v76, 4294901760
    %v2649 = vsub.f32 %v76, %v2648
    %v2650 = vand.u32 %v2649, 4294901760
    %2651 = vmatpush1.msra.mxu0 %v2650
    %v2652 = vand.u32 %v71, 4294901760
    %v2653 = vsub.f32 %v71, %v2652
    %v2654 = vand.u32 %v2653, 4294901760
    %2655 = vmatprep.subr.mxu0 %v2654
    %v2656 = vand.u32 %v70, 4294901760
    %v2657 = vsub.f32 %v70, %v2656
    %v2658 = vand.u32 %v2657, 4294901760
    %2659 = vmatpush1.msra.mxu0 %v2658
    %v2660 = vand.u32 %v65, 4294901760
    %v2661 = vsub.f32 %v65, %v2660
    %v2662 = vand.u32 %v2661, 4294901760
    %2663 = vmatprep.subr.mxu0 %v2662
    %v2664 = vand.u32 %v64, 4294901760
    %v2665 = vsub.f32 %v64, %v2664
    %v2666 = vand.u32 %v2665, 4294901760
    %2667 = vmatpush1.msra.mxu0 %v2666
    %v2668 = vand.u32 %v59, 4294901760
    %v2669 = vsub.f32 %v59, %v2668
    %v2670 = vand.u32 %v2669, 4294901760
    %2671 = vmatprep.subr.mxu0 %v2670
    %v2672 = vand.u32 %v58, 4294901760
    %v2673 = vsub.f32 %v58, %v2672
    %v2674 = vand.u32 %v2673, 4294901760
    %2675 = vmatpush1.msra.mxu0 %v2674
    %v2676 = vand.u32 %v53, 4294901760
    %v2677 = vsub.f32 %v53, %v2676
    %v2678 = vand.u32 %v2677, 4294901760
    %2679 = vmatprep.subr.mxu0 %v2678
    %v2680 = vand.u32 %v52, 4294901760
    %v2681 = vsub.f32 %v52, %v2680
    %v2682 = vand.u32 %v2681, 4294901760
    %2683 = vmatpush1.msra.mxu0 %v2682
    %v2684 = vand.u32 %v47, 4294901760
    %v2685 = vsub.f32 %v47, %v2684
    %v2686 = vand.u32 %v2685, 4294901760
    %2687 = vmatprep.subr.mxu0 %v2686
    %v2688 = vand.u32 %v46, 4294901760
    %v2689 = vsub.f32 %v46, %v2688
    %v2690 = vand.u32 %v2689, 4294901760
    %2691 = vmatpush1.msra.mxu0 %v2690
    %2692 = vmatprep.subr.mxu0 0.0
    %2693 = vmatpush2.msra.mxu0 0.0
    %2694 = vmatprep.subr.mxu0 0.0
    %2695 = vmatpush2.msra.mxu0 0.0
    %2696 = vmatprep.subr.mxu0 0.0
    %2697 = vmatpush2.msra.mxu0 0.0
    %2698 = vmatprep.subr.mxu0 0.0
    %2699 = vmatpush2.msra.mxu0 0.0
    %2700 = vmatprep.subr.mxu0 0.0
    %2701 = vmatpush2.msra.mxu0 0.0
    %2702 = vmatprep.subr.mxu0 0.0
    %2703 = vmatpush2.msra.mxu0 0.0
    %2704 = vmatprep.subr.mxu0 0.0
    %2705 = vmatpush2.msra.mxu0 0.0
    %2706 = vmatprep.subr.mxu0 0.0
    %2707 = vmatpush2.msra.mxu0 0.0
    %2708 = vmatprep.subr.mxu0 0.0
    %2709 = vmatpush2.msra.mxu0 0.0
    %2710 = vmatprep.subr.mxu0 0.0
    %2711 = vmatpush2.msra.mxu0 0.0
    %2712 = vmatprep.subr.mxu0 0.0
    %2713 = vmatpush2.msra.mxu0 0.0
    %2714 = vmatprep.subr.mxu0 0.0
    %2715 = vmatpush2.msra.mxu0 0.0
    %2716 = vmatprep.subr.mxu0 0.0
    %2717 = vmatpush2.msra.mxu0 0.0
    %2718 = vmatprep.subr.mxu0 0.0
    %2719 = vmatpush2.msra.mxu0 0.0
    %2720 = vmatprep.subr.mxu0 0.0
    %2721 = vmatpush2.msra.mxu0 0.0
    %2722 = vmatprep.subr.mxu0 0.0
    %2723 = vmatpush2.msra.mxu0 0.0
    %2724 = vmatprep.mubr.f32.mxu0 0.0
    %v2725 = vand.u32 %v40, 4294901760
    %2726 = vmatmul.mubr.f32.gmra.mxu0 %v2725
    %v2727 = vpop.f32.mrf.mxu0
    %v2728 = vadd.f32 %v2551, %v2727
    %v2729 = vpop.f32.mrf.mxu0
    %v2730 = vadd.f32 %v2553, %v2729
    %2731 = vmatprep.mubr.f32.mxu0 0.0
    %v2732 = vand.u32 %v41, 4294901760
    %2733 = vmatmul.mubr.f32.gmra.mxu0 %v2732
    %v2734 = vpop.f32.mrf.mxu0
    %v2735 = vadd.f32 %v2560, %v2734
    %v2736 = vpop.f32.mrf.mxu0
    %v2737 = vadd.f32 %v2562, %v2736
    %2738 = vdwg.mxu0
    %v2739 = vand.u32 %v137, 4294901760
    %2740 = vmatprep.subr.mxu0 %v2739
    %v2741 = vand.u32 %v136, 4294901760
    %2742 = vmatpush1.msra.mxu0 %v2741
    %v2743 = vand.u32 %v131, 4294901760
    %2744 = vmatprep.subr.mxu0 %v2743
    %v2745 = vand.u32 %v130, 4294901760
    %2746 = vmatpush1.msra.mxu0 %v2745
    %v2747 = vand.u32 %v125, 4294901760
    %2748 = vmatprep.subr.mxu0 %v2747
    %v2749 = vand.u32 %v124, 4294901760
    %2750 = vmatpush1.msra.mxu0 %v2749
    %v2751 = vand.u32 %v119, 4294901760
    %2752 = vmatprep.subr.mxu0 %v2751
    %v2753 = vand.u32 %v118, 4294901760
    %2754 = vmatpush1.msra.mxu0 %v2753
    %v2755 = vand.u32 %v113, 4294901760
    %2756 = vmatprep.subr.mxu0 %v2755
    %v2757 = vand.u32 %v112, 4294901760
    %2758 = vmatpush1.msra.mxu0 %v2757
    %v2759 = vand.u32 %v107, 4294901760
    %2760 = vmatprep.subr.mxu0 %v2759
    %v2761 = vand.u32 %v106, 4294901760
    %2762 = vmatpush1.msra.mxu0 %v2761
    %v2763 = vand.u32 %v101, 4294901760
    %2764 = vmatprep.subr.mxu0 %v2763
    %v2765 = vand.u32 %v100, 4294901760
    %2766 = vmatpush1.msra.mxu0 %v2765
    %v2767 = vand.u32 %v95, 4294901760
    %2768 = vmatprep.subr.mxu0 %v2767
    %v2769 = vand.u32 %v94, 4294901760
    %2770 = vmatpush1.msra.mxu0 %v2769
    %v2771 = vand.u32 %v89, 4294901760
    %2772 = vmatprep.subr.mxu0 %v2771
    %v2773 = vand.u32 %v88, 4294901760
    %2774 = vmatpush1.msra.mxu0 %v2773
    %v2775 = vand.u32 %v83, 4294901760
    %2776 = vmatprep.subr.mxu0 %v2775
    %v2777 = vand.u32 %v82, 4294901760
    %2778 = vmatpush1.msra.mxu0 %v2777
    %v2779 = vand.u32 %v77, 4294901760
    %2780 = vmatprep.subr.mxu0 %v2779
    %v2781 = vand.u32 %v76, 4294901760
    %2782 = vmatpush1.msra.mxu0 %v2781
    %v2783 = vand.u32 %v71, 4294901760
    %2784 = vmatprep.subr.mxu0 %v2783
    %v2785 = vand.u32 %v70, 4294901760
    %2786 = vmatpush1.msra.mxu0 %v2785
    %v2787 = vand.u32 %v65, 4294901760
    %2788 = vmatprep.subr.mxu0 %v2787
    %v2789 = vand.u32 %v64, 4294901760
    %2790 = vmatpush1.msra.mxu0 %v2789
    %v2791 = vand.u32 %v59, 4294901760
    %2792 = vmatprep.subr.mxu0 %v2791
    %v2793 = vand.u32 %v58, 4294901760
    %2794 = vmatpush1.msra.mxu0 %v2793
    %v2795 = vand.u32 %v53, 4294901760
    %2796 = vmatprep.subr.mxu0 %v2795
    %v2797 = vand.u32 %v52, 4294901760
    %2798 = vmatpush1.msra.mxu0 %v2797
    %v2799 = vand.u32 %v47, 4294901760
    %2800 = vmatprep.subr.mxu0 %v2799
    %v2801 = vand.u32 %v46, 4294901760
    %2802 = vmatpush1.msra.mxu0 %v2801
    %2803 = vmatprep.subr.mxu0 0.0
    %2804 = vmatpush2.msra.mxu0 0.0
    %2805 = vmatprep.subr.mxu0 0.0
    %2806 = vmatpush2.msra.mxu0 0.0
    %2807 = vmatprep.subr.mxu0 0.0
    %2808 = vmatpush2.msra.mxu0 0.0
    %2809 = vmatprep.subr.mxu0 0.0
    %2810 = vmatpush2.msra.mxu0 0.0
    %2811 = vmatprep.subr.mxu0 0.0
    %2812 = vmatpush2.msra.mxu0 0.0
    %2813 = vmatprep.subr.mxu0 0.0
    %2814 = vmatpush2.msra.mxu0 0.0
    %2815 = vmatprep.subr.mxu0 0.0
    %2816 = vmatpush2.msra.mxu0 0.0
    %2817 = vmatprep.subr.mxu0 0.0
    %2818 = vmatpush2.msra.mxu0 0.0
    %2819 = vmatprep.subr.mxu0 0.0
    %2820 = vmatpush2.msra.mxu0 0.0
    %2821 = vmatprep.subr.mxu0 0.0
    %2822 = vmatpush2.msra.mxu0 0.0
    %2823 = vmatprep.subr.mxu0 0.0
    %2824 = vmatpush2.msra.mxu0 0.0
    %2825 = vmatprep.subr.mxu0 0.0
    %2826 = vmatpush2.msra.mxu0 0.0
    %2827 = vmatprep.subr.mxu0 0.0
    %2828 = vmatpush2.msra.mxu0 0.0
    %2829 = vmatprep.subr.mxu0 0.0
    %2830 = vmatpush2.msra.mxu0 0.0
    %2831 = vmatprep.subr.mxu0 0.0
    %2832 = vmatpush2.msra.mxu0 0.0
    %2833 = vmatprep.subr.mxu0 0.0
    %2834 = vmatpush2.msra.mxu0 0.0
    %2835 = vmatprep.mubr.f32.mxu0 0.0
    %v2836 = vand.u32 %v40, 4294901760
    %2837 = vmatmul.mubr.f32.gmra.mxu0 %v2836
    %v2838 = vpop.f32.mrf.mxu0
    %v2839 = vadd.f32 %v2728, %v2838
    %v2840 = vpop.f32.mrf.mxu0
    %v2841 = vadd.f32 %v2730, %v2840
    %2842 = vmatprep.mubr.f32.mxu0 0.0
    %v2843 = vand.u32 %v41, 4294901760
    %2844 = vmatmul.mubr.f32.gmra.mxu0 %v2843
    %v2845 = vpop.f32.mrf.mxu0
    %v2846 = vadd.f32 %v2735, %v2845
    %v2847 = vpop.f32.mrf.mxu0
    %v2848 = vadd.f32 %v2737, %v2847
    %2849 = vdwg.mxu0
    %v2850 = vmul.f32 %v1031, 27.712812
    %v2851 = vmul.f32 %v1033, 27.712812
    %v2852 = vmul.f32 %v1935, 27.712812
    %v2853 = vmul.f32 %v1937, 27.712812
    %v2854 = vmul.f32 %v2839, 27.712812
    %v2855 = vmul.f32 %v2841, 27.712812
    %v2856 = vmul.f32 %v1038, 27.712812
    %v2857 = vmul.f32 %v1040, 27.712812
    %v2858 = vmul.f32 %v1942, 27.712812
    %v2859 = vmul.f32 %v1944, 27.712812
    %v2860 = vmul.f32 %v2846, 27.712812
    %v2861 = vmul.f32 %v2848, 27.712812
    %2862 = vst [vmem:[#allocation5] sm:$0xff] %v2850
    %2863 = vst [vmem:[#allocation5 + $0x8] sm:$0xff] %v2851
    %2864 = vst [vmem:[#allocation5 + $0x10] sm:$0xff] %v2852
    %2865 = vst [vmem:[#allocation5 + $0x18] sm:$0xff] %v2853
    %2866 = vst [vmem:[#allocation5 + $0x20] sm:$0xff] %v2854
    %2867 = vst [vmem:[#allocation5 + $0x28] sm:$0xff] %v2855
    %2868 = vst [vmem:[#allocation5 + $0x30] sm:$0xff] %v2856
    %2869 = vst [vmem:[#allocation5 + $0x38] sm:$0xff] %v2857
    %2870 = vst [vmem:[#allocation5 + $0x40] sm:$0xff] %v2858
    %2871 = vst [vmem:[#allocation5 + $0x48] sm:$0xff] %v2859
    %2872 = vst [vmem:[#allocation5 + $0x50] sm:$0xff] %v2860
    %2873 = vst [vmem:[#allocation5 + $0x58] sm:$0xff] %v2861
    // Predicated region
    $region14: #{tpu_custom_call.1} parent=1 // pred_check
      _
    $region15: #{tpu_custom_call.1} parent=1 // pred_check_branch
      %2875 = sbr.rel (0) target = $region17
    $region16: #{tpu_custom_call.1} parent=1 // pred_region
      %s2877 = ssub.s32 1536, 1536
      %2878 = vsyncadd [#allocation4], %s2877
      %s2879 = sshll.u32 [#allocation5], 4
      %s2880 = int_to_ptr.vmem [resolvable:$true] %s2879
      %2885 = dma.vmem_to_hbm [thread:$0]  %s2880, 1536, %s2, [#allocation4], 768, 768, 48
    $region17: #{tpu_custom_call.1} parent=1 // pred_fallthru
      _
    // Predicated region
    $region18: #{tpu_custom_call.1} parent=1 // pred_check
      _
    $region19: #{tpu_custom_call.1} parent=1 // pred_check_branch
      %2887 = sbr.rel (0) target = $region21
    $region20: #{tpu_custom_call.1} parent=1 // pred_region
      %2888 = dma.done [#allocation4], 1536
    $region21: #{tpu_custom_call.1} parent=1 // pred_fallthru
      _
    %2889 = vsyncpa [#allocation3], 1
    %2890 = vsyncpa [#allocation4], 1

</llo_original>
